<compile_context>
chip_gen: v5e
topology: v5e:2x2
jax: 0.10.0
libtpu: 0.0.40
codegen_flags: <defaults>
</compile_context>

<pallas_src>
import jax
import jax.numpy as jnp
from jax.experimental import pallas as pl
from jax.experimental.pallas import tpu as pltpu

# Layer widths of MappingNetwork(z_dims=512)
Z_DIMS = 512
WIDTHS = [Z_DIMS, 256, 128, 64, 32, 64, 128, 256, 512]
NUM_LAYERS = len(WIDTHS) - 1
TOTAL_MACS = sum(WIDTHS[i] * WIDTHS[i + 1] for i in range(NUM_LAYERS))  # 348160


def _spectral_normalize(w, n_iters=20):
    """weight / sigma via power iteration (mirrors nn.utils.spectral_norm eval path)."""
    # TODO(synk): torch's spectral_norm updates u once per forward in training mode;
    # here sigma is frozen at init (eval-mode semantics).
    out_dim, _ = w.shape
    u = jnp.ones((out_dim,), w.dtype) / jnp.sqrt(jnp.asarray(out_dim, w.dtype))

    def body(_, u):
        v = w.T @ u
        v = v / (jnp.linalg.norm(v) + 1e-12)
        u = w @ v
        u = u / (jnp.linalg.norm(u) + 1e-12)
        return u

    u = jax.lax.fori_loop(0, n_iters, body, u)
    v = w.T @ u
    v = v / (jnp.linalg.norm(v) + 1e-12)
    sigma = u @ (w @ v)
    return w / sigma


def _init_params(key):
    """Per-layer (W^T as (in, out) fp32, spectrally normalized; b as (out,) fp32)."""
    params = []
    for i in range(NUM_LAYERS):
        in_c, out_c = WIDTHS[i], WIDTHS[i + 1]
        key, kw, kb = jax.random.split(key, 3)
        bound = 1.0 / jnp.sqrt(jnp.asarray(in_c, jnp.float32))
        w = jax.random.uniform(kw, (out_c, in_c), jnp.float32, -bound, bound)
        b = jax.random.uniform(kb, (out_c,), jnp.float32, -bound, bound)
        w = _spectral_normalize(w)
        params.append((w.T, b))  # (in, out), (out,)
    return params


def _pack_params(params):
    """Pack 16 small param operands into 5 lane-dense operands:
       - w06 : rows [W0^T (512,256); W6^T (128,256)]            bf16 (640, 256)
       - w1  : W1^T                                             bf16 (256, 128)
       - wmid: layers 2..5, each W^T zero-padded to (128,128)   bf16 (4, 128, 128)
       - w7  : W7^T                                             bf16 (256, 512)
       - bias: all 8 biases in one zero-filled table            fp32 (8, 512)
    """
    wt = [w.astype(jnp.bfloat16) for (w, _) in params]
    w06 = jnp.concatenate([wt[0], wt[6]], axis=0)   # (640, 256)
    w1 = wt[1]                                      # (256, 128)
    w7 = wt[7]                                      # (256, 512)
    mid = []
    for li in (2, 3, 4, 5):
        w = wt[li]
        w = jnp.pad(w, ((0, 128 - w.shape[0]), (0, 128 - w.shape[1])))
        mid.append(w)
    wmid = jnp.stack(mid, axis=0)                   # (4, 128, 128)
    bias = jnp.zeros((NUM_LAYERS, Z_DIMS), jnp.float32)
    for i, (_, b) in enumerate(params):
        bias = bias.at[i, : b.shape[0]].set(b)
    return (w06, w1, wmid, w7, bias)


def mapping_kernel(x_ref, w06_ref, w1_ref, wmid_ref, w7_ref, b_ref, out_ref):
    def layer(h, w, i, out_c):
        acc = jnp.dot(h, w, preferred_element_type=jnp.float32)  # bf16 MXU, f32 acc
        acc = acc + b_ref[i:i + 1, :out_c]                        # lane-dense slice
        return jnp.maximum(acc, 0.2 * acc)                        # LeakyReLU(0.2)

    h = x_ref[...]                                                # (TILE_B, 512) bf16
    h = layer(h, w06_ref[0:512, :], 0, 256).astype(jnp.bfloat16)
    h = layer(h, w1_ref[...],       1, 128).astype(jnp.bfloat16)
    # Middle layers: uniform lane-padded 128x128 tiles; padded lanes stay exactly 0.
    h = layer(h, wmid_ref[0],       2, 128).astype(jnp.bfloat16)
    h = layer(h, wmid_ref[1],       3, 128).astype(jnp.bfloat16)
    h = layer(h, wmid_ref[2],       4, 128).astype(jnp.bfloat16)
    h = layer(h, wmid_ref[3],       5, 128).astype(jnp.bfloat16)
    h = layer(h, w06_ref[512:640, :], 6, 256).astype(jnp.bfloat16)
    out_ref[...] = layer(h, w7_ref[...], 7, 512)                  # fp32, lane-dense


@jax.jit
def mapping_network(x, packed):
    w06, w1, wmid, w7, bias = packed
    B = x.shape[0]
    x = x.astype(jnp.bfloat16)   # bf16 activation path (MXU inputs are bf16 anyway)

    if B <= 512:
        TILE_B = B               # single grid step for small batches
    else:
        # Keep >= 2 grid steps so v7x's 2 TensorCores both get work; tile is a
        # multiple of 256 (fills v6e/v7x MXU M rows, 2x the v5e 128-row MXU).
        TILE_B = min(1024, 256 * pl.cdiv(pl.cdiv(B, 2), 256))
    n_tiles = pl.cdiv(B, TILE_B)
    Bp = n_tiles * TILE_B
    if Bp != B:
        x = jnp.pad(x, ((0, Bp - B), (0, 0)))

    def resident(arr):
        # Constant index_map -> operand stays resident in VMEM across grid steps.
        # NOTE: could be single-buffered (pipeline_mode=pl.Buffered(1)); skipped,
        # VMEM headroom is ample at these sizes.
        zeros = (0,) * arr.ndim
        return pl.BlockSpec(arr.shape, lambda i, z=zeros: z)

    param_bytes = sum(int(a.size) * a.dtype.itemsize
                      for a in (w06, w1, wmid, w7, bias))
    cost = pl.CostEstimate(
        flops=2 * Bp * TOTAL_MACS,
        transcendentals=0,
        bytes_accessed=param_bytes + Bp * Z_DIMS * 2 + Bp * WIDTHS[-1] * 4,
    )

    out = pl.pallas_call(
        mapping_kernel,
        out_shape=jax.ShapeDtypeStruct((Bp, WIDTHS[-1]), jnp.float32),
        grid=(n_tiles,),
        in_specs=[
            pl.BlockSpec((TILE_B, Z_DIMS), lambda i: (i, 0)),
            resident(w06),
            resident(w1),
            resident(wmid),
            resident(w7),
            resident(bias),
        ],
        out_specs=pl.BlockSpec((TILE_B, WIDTHS[-1]), lambda i: (i, 0)),
        compiler_params=pltpu.CompilerParams(
            dimension_semantics=("parallel",),
            vmem_limit_bytes=32 * 1024 * 1024,
        ),
        cost_estimate=cost,
    )(x, w06, w1, wmid, w7, bias)
    return out[:B]


def _reference(x, params):
    """Mirror the kernel numerics: bf16 activations/weights into the MXU,
    fp32 accumulation, fp32 bias + LeakyReLU(0.2)."""
    h = x.astype(jnp.bfloat16)
    out = None
    for (w, b) in params:
        out = jnp.dot(h, w.astype(jnp.bfloat16),
                      preferred_element_type=jnp.float32) + b
        out = jnp.maximum(out, 0.2 * out)
        h = out.astype(jnp.bfloat16)
    return out


if __name__ == "__main__":
    key = jax.random.PRNGKey(0)
    key, kx = jax.random.split(key)

    B = 8
    x = jax.random.normal(kx, (B, Z_DIMS), jnp.float32)
    params = _init_params(key)
    packed = _pack_params(params)

    out = mapping_network(x, packed)
    out = jax.block_until_ready(out)

    ref = _reference(x, params)
    assert out.shape == (B, WIDTHS[-1]), out.shape
    # bf16 weights/activations -> relaxed tolerance vs fp32-exact torch module.
    assert jnp.allclose(out, ref, atol=1e-2, rtol=1e-2), (
        float(jnp.max(jnp.abs(out - ref))))

    print("KERNEL_OK")
</pallas_src>

<mosaic_0001>
module attributes {stable_mosaic.version = 11 : i64} {
  func.func @mapping_kernel(%arg0: i32, %arg1: memref<8x512xbf16, #tpu.memory_space<vmem>>, %arg2: memref<640x256xbf16, #tpu.memory_space<vmem>>, %arg3: memref<256x128xbf16, #tpu.memory_space<vmem>>, %arg4: memref<4x128x128xbf16, #tpu.memory_space<vmem>>, %arg5: memref<256x512xbf16, #tpu.memory_space<vmem>>, %arg6: memref<8x512xf32, #tpu.memory_space<vmem>>, %arg7: memref<8x512xf32, #tpu.memory_space<vmem>>) attributes {dimension_semantics = [#tpu.dimension_semantics<parallel>], iteration_bounds = array<i64: 1>, scalar_prefetch = 0 : i64, scratch_operands = 0 : i64, tpu.core_type = #tpu.core_type<tc>, window_params = [{transform_indices = @transform_0, window_bounds = array<i64: 8, 512>}, {pipeline_mode = #tpu.pipeline_mode<synchronous>, transform_indices = @transform_1, window_bounds = array<i64: 640, 256>}, {pipeline_mode = #tpu.pipeline_mode<synchronous>, transform_indices = @transform_2, window_bounds = array<i64: 256, 128>}, {pipeline_mode = #tpu.pipeline_mode<synchronous>, transform_indices = @transform_3, window_bounds = array<i64: 4, 128, 128>}, {pipeline_mode = #tpu.pipeline_mode<synchronous>, transform_indices = @transform_4, window_bounds = array<i64: 256, 512>}, {pipeline_mode = #tpu.pipeline_mode<synchronous>, transform_indices = @transform_5, window_bounds = array<i64: 8, 512>}, {transform_indices = @transform_6, window_bounds = array<i64: 8, 512>}]} {
    %c0 = arith.constant 0 : index
    %c0_0 = arith.constant 0 : index
    %0 = vector.load %arg1[%c0, %c0_0] : memref<8x512xbf16, #tpu.memory_space<vmem>>, vector<8x512xbf16>
    %c0_1 = arith.constant 0 : index
    %c0_2 = arith.constant 0 : index
    %1 = vector.load %arg2[%c0_1, %c0_2] : memref<640x256xbf16, #tpu.memory_space<vmem>>, vector<512x256xbf16>
    %cst = arith.constant dense<0.000000e+00> : vector<8x256xf32>
    %2 = tpu.matmul %0, %1, %cst {dimension_numbers = #tpu.dot_dimension_numbers<[1], [0], [0], [1], [0, 0, 1, 1], [], []>} : vector<8x512xbf16>, vector<512x256xbf16>, vector<8x256xf32> -> vector<8x256xf32>
    %c0_3 = arith.constant 0 : index
    %c0_4 = arith.constant 0 : index
    %3 = vector.load %arg6[%c0_3, %c0_4] : memref<8x512xf32, #tpu.memory_space<vmem>>, vector<1x256xf32>
    %4 = vector.broadcast %3 : vector<1x256xf32> to vector<8x256xf32>
    %5 = arith.addf %2, %4 : vector<8x256xf32>
    %cst_5 = arith.constant 2.000000e-01 : f32
    %6 = vector.broadcast %cst_5 : f32 to vector<8x256xf32>
    %7 = arith.mulf %6, %5 : vector<8x256xf32>
    %8 = arith.maximumf %5, %7 : vector<8x256xf32>
    %9 = arith.truncf %8 : vector<8x256xf32> to vector<8x256xbf16>
    %c0_6 = arith.constant 0 : index
    %c0_7 = arith.constant 0 : index
    %10 = vector.load %arg3[%c0_6, %c0_7] : memref<256x128xbf16, #tpu.memory_space<vmem>>, vector<256x128xbf16>
    %cst_8 = arith.constant dense<0.000000e+00> : vector<8x128xf32>
    %11 = tpu.matmul %9, %10, %cst_8 {dimension_numbers = #tpu.dot_dimension_numbers<[1], [0], [0], [1], [0, 0, 1, 1], [], []>} : vector<8x256xbf16>, vector<256x128xbf16>, vector<8x128xf32> -> vector<8x128xf32>
    %c1 = arith.constant 1 : index
    %c0_9 = arith.constant 0 : index
    %12 = vector.load %arg6[%c1, %c0_9] : memref<8x512xf32, #tpu.memory_space<vmem>>, vector<1x128xf32>
    %13 = vector.broadcast %12 : vector<1x128xf32> to vector<8x128xf32>
    %14 = arith.addf %11, %13 : vector<8x128xf32>
    %cst_10 = arith.constant 2.000000e-01 : f32
    %15 = vector.broadcast %cst_10 : f32 to vector<8x128xf32>
    %16 = arith.mulf %15, %14 : vector<8x128xf32>
    %17 = arith.maximumf %14, %16 : vector<8x128xf32>
    %18 = arith.truncf %17 : vector<8x128xf32> to vector<8x128xbf16>
    %c0_11 = arith.constant 0 : index
    %c0_12 = arith.constant 0 : index
    %c0_13 = arith.constant 0 : index
    %19 = vector.load %arg4[%c0_11, %c0_12, %c0_13] : memref<4x128x128xbf16, #tpu.memory_space<vmem>>, vector<1x128x128xbf16>
    %20 = vector.shape_cast %19 : vector<1x128x128xbf16> to vector<128x128xbf16>
    %cst_14 = arith.constant dense<0.000000e+00> : vector<8x128xf32>
    %21 = tpu.matmul %18, %20, %cst_14 {dimension_numbers = #tpu.dot_dimension_numbers<[1], [0], [0], [1], [0, 0, 1, 1], [], []>} : vector<8x128xbf16>, vector<128x128xbf16>, vector<8x128xf32> -> vector<8x128xf32>
    %c2 = arith.constant 2 : index
    %c0_15 = arith.constant 0 : index
    %22 = vector.load %arg6[%c2, %c0_15] : memref<8x512xf32, #tpu.memory_space<vmem>>, vector<1x128xf32>
    %23 = vector.broadcast %22 : vector<1x128xf32> to vector<8x128xf32>
    %24 = arith.addf %21, %23 : vector<8x128xf32>
    %cst_16 = arith.constant 2.000000e-01 : f32
    %25 = vector.broadcast %cst_16 : f32 to vector<8x128xf32>
    %26 = arith.mulf %25, %24 : vector<8x128xf32>
    %27 = arith.maximumf %24, %26 : vector<8x128xf32>
    %28 = arith.truncf %27 : vector<8x128xf32> to vector<8x128xbf16>
    %c1_17 = arith.constant 1 : index
    %c0_18 = arith.constant 0 : index
    %c0_19 = arith.constant 0 : index
    %29 = vector.load %arg4[%c1_17, %c0_18, %c0_19] : memref<4x128x128xbf16, #tpu.memory_space<vmem>>, vector<1x128x128xbf16>
    %30 = vector.shape_cast %29 : vector<1x128x128xbf16> to vector<128x128xbf16>
    %cst_20 = arith.constant dense<0.000000e+00> : vector<8x128xf32>
    %31 = tpu.matmul %28, %30, %cst_20 {dimension_numbers = #tpu.dot_dimension_numbers<[1], [0], [0], [1], [0, 0, 1, 1], [], []>} : vector<8x128xbf16>, vector<128x128xbf16>, vector<8x128xf32> -> vector<8x128xf32>
    %c3 = arith.constant 3 : index
    %c0_21 = arith.constant 0 : index
    %32 = vector.load %arg6[%c3, %c0_21] : memref<8x512xf32, #tpu.memory_space<vmem>>, vector<1x128xf32>
    %33 = vector.broadcast %32 : vector<1x128xf32> to vector<8x128xf32>
    %34 = arith.addf %31, %33 : vector<8x128xf32>
    %cst_22 = arith.constant 2.000000e-01 : f32
    %35 = vector.broadcast %cst_22 : f32 to vector<8x128xf32>
    %36 = arith.mulf %35, %34 : vector<8x128xf32>
    %37 = arith.maximumf %34, %36 : vector<8x128xf32>
    %38 = arith.truncf %37 : vector<8x128xf32> to vector<8x128xbf16>
    %c2_23 = arith.constant 2 : index
    %c0_24 = arith.constant 0 : index
    %c0_25 = arith.constant 0 : index
    %39 = vector.load %arg4[%c2_23, %c0_24, %c0_25] : memref<4x128x128xbf16, #tpu.memory_space<vmem>>, vector<1x128x128xbf16>
    %40 = vector.shape_cast %39 : vector<1x128x128xbf16> to vector<128x128xbf16>
    %cst_26 = arith.constant dense<0.000000e+00> : vector<8x128xf32>
    %41 = tpu.matmul %38, %40, %cst_26 {dimension_numbers = #tpu.dot_dimension_numbers<[1], [0], [0], [1], [0, 0, 1, 1], [], []>} : vector<8x128xbf16>, vector<128x128xbf16>, vector<8x128xf32> -> vector<8x128xf32>
    %c4 = arith.constant 4 : index
    %c0_27 = arith.constant 0 : index
    %42 = vector.load %arg6[%c4, %c0_27] : memref<8x512xf32, #tpu.memory_space<vmem>>, vector<1x128xf32>
    %43 = vector.broadcast %42 : vector<1x128xf32> to vector<8x128xf32>
    %44 = arith.addf %41, %43 : vector<8x128xf32>
    %cst_28 = arith.constant 2.000000e-01 : f32
    %45 = vector.broadcast %cst_28 : f32 to vector<8x128xf32>
    %46 = arith.mulf %45, %44 : vector<8x128xf32>
    %47 = arith.maximumf %44, %46 : vector<8x128xf32>
    %48 = arith.truncf %47 : vector<8x128xf32> to vector<8x128xbf16>
    %c3_29 = arith.constant 3 : index
    %c0_30 = arith.constant 0 : index
    %c0_31 = arith.constant 0 : index
    %49 = vector.load %arg4[%c3_29, %c0_30, %c0_31] : memref<4x128x128xbf16, #tpu.memory_space<vmem>>, vector<1x128x128xbf16>
    %50 = vector.shape_cast %49 : vector<1x128x128xbf16> to vector<128x128xbf16>
    %cst_32 = arith.constant dense<0.000000e+00> : vector<8x128xf32>
    %51 = tpu.matmul %48, %50, %cst_32 {dimension_numbers = #tpu.dot_dimension_numbers<[1], [0], [0], [1], [0, 0, 1, 1], [], []>} : vector<8x128xbf16>, vector<128x128xbf16>, vector<8x128xf32> -> vector<8x128xf32>
    %c5 = arith.constant 5 : index
    %c0_33 = arith.constant 0 : index
    %52 = vector.load %arg6[%c5, %c0_33] : memref<8x512xf32, #tpu.memory_space<vmem>>, vector<1x128xf32>
    %53 = vector.broadcast %52 : vector<1x128xf32> to vector<8x128xf32>
    %54 = arith.addf %51, %53 : vector<8x128xf32>
    %cst_34 = arith.constant 2.000000e-01 : f32
    %55 = vector.broadcast %cst_34 : f32 to vector<8x128xf32>
    %56 = arith.mulf %55, %54 : vector<8x128xf32>
    %57 = arith.maximumf %54, %56 : vector<8x128xf32>
    %58 = arith.truncf %57 : vector<8x128xf32> to vector<8x128xbf16>
    %c512 = arith.constant 512 : index
    %c0_35 = arith.constant 0 : index
    %59 = vector.load %arg2[%c512, %c0_35] : memref<640x256xbf16, #tpu.memory_space<vmem>>, vector<128x256xbf16>
    %cst_36 = arith.constant dense<0.000000e+00> : vector<8x256xf32>
    %60 = tpu.matmul %58, %59, %cst_36 {dimension_numbers = #tpu.dot_dimension_numbers<[1], [0], [0], [1], [0, 0, 1, 1], [], []>} : vector<8x128xbf16>, vector<128x256xbf16>, vector<8x256xf32> -> vector<8x256xf32>
    %c6 = arith.constant 6 : index
    %c0_37 = arith.constant 0 : index
    %61 = vector.load %arg6[%c6, %c0_37] : memref<8x512xf32, #tpu.memory_space<vmem>>, vector<1x256xf32>
    %62 = vector.broadcast %61 : vector<1x256xf32> to vector<8x256xf32>
    %63 = arith.addf %60, %62 : vector<8x256xf32>
    %cst_38 = arith.constant 2.000000e-01 : f32
    %64 = vector.broadcast %cst_38 : f32 to vector<8x256xf32>
    %65 = arith.mulf %64, %63 : vector<8x256xf32>
    %66 = arith.maximumf %63, %65 : vector<8x256xf32>
    %67 = arith.truncf %66 : vector<8x256xf32> to vector<8x256xbf16>
    %c0_39 = arith.constant 0 : index
    %c0_40 = arith.constant 0 : index
    %68 = vector.load %arg5[%c0_39, %c0_40] : memref<256x512xbf16, #tpu.memory_space<vmem>>, vector<256x512xbf16>
    %cst_41 = arith.constant dense<0.000000e+00> : vector<8x512xf32>
    %69 = tpu.matmul %67, %68, %cst_41 {dimension_numbers = #tpu.dot_dimension_numbers<[1], [0], [0], [1], [0, 0, 1, 1], [], []>} : vector<8x256xbf16>, vector<256x512xbf16>, vector<8x512xf32> -> vector<8x512xf32>
    %c7 = arith.constant 7 : index
    %c0_42 = arith.constant 0 : index
    %70 = vector.load %arg6[%c7, %c0_42] : memref<8x512xf32, #tpu.memory_space<vmem>>, vector<1x512xf32>
    %71 = vector.broadcast %70 : vector<1x512xf32> to vector<8x512xf32>
    %72 = arith.addf %69, %71 : vector<8x512xf32>
    %cst_43 = arith.constant 2.000000e-01 : f32
    %73 = vector.broadcast %cst_43 : f32 to vector<8x512xf32>
    %74 = arith.mulf %73, %72 : vector<8x512xf32>
    %75 = arith.maximumf %72, %74 : vector<8x512xf32>
    %c0_44 = arith.constant 0 : index
    %c0_45 = arith.constant 0 : index
    %76 = vector.load %arg7[%c0_44, %c0_45] : memref<8x512xf32, #tpu.memory_space<vmem>>, vector<8x512xf32>
    tpu.vector_store %arg7[%c0_44, %c0_45], %75 {strides = array<i32>} : memref<8x512xf32, #tpu.memory_space<vmem>>, vector<8x512xf32>,
    return
  }
  func.func @transform_0(%arg0: i32) -> (i32, i32) {
    %c0_i32 = arith.constant 0 : i32
    %c0_i32_0 = arith.constant 0 : i32
    return %arg0, %c0_i32 : i32, i32
  }
  func.func @transform_1(%arg0: i32) -> (i32, i32) {
    %c0_i32 = arith.constant 0 : i32
    %c0_i32_0 = arith.constant 0 : i32
    %c0_i32_1 = arith.constant 0 : i32
    return %c0_i32, %c0_i32_0 : i32, i32
  }
  func.func @transform_2(%arg0: i32) -> (i32, i32) {
    %c0_i32 = arith.constant 0 : i32
    %c0_i32_0 = arith.constant 0 : i32
    %c0_i32_1 = arith.constant 0 : i32
    return %c0_i32, %c0_i32_0 : i32, i32
  }
  func.func @transform_3(%arg0: i32) -> (i32, i32, i32) {
    %c0_i32 = arith.constant 0 : i32
    %c0_i32_0 = arith.constant 0 : i32
    %c0_i32_1 = arith.constant 0 : i32
    %c0_i32_2 = arith.constant 0 : i32
    return %c0_i32, %c0_i32_0, %c0_i32_1 : i32, i32, i32
  }
  func.func @transform_4(%arg0: i32) -> (i32, i32) {
    %c0_i32 = arith.constant 0 : i32
    %c0_i32_0 = arith.constant 0 : i32
    %c0_i32_1 = arith.constant 0 : i32
    return %c0_i32, %c0_i32_0 : i32, i32
  }
  func.func @transform_5(%arg0: i32) -> (i32, i32) {
    %c0_i32 = arith.constant 0 : i32
    %c0_i32_0 = arith.constant 0 : i32
    %c0_i32_1 = arith.constant 0 : i32
    return %c0_i32, %c0_i32_0 : i32, i32
  }
  func.func @transform_6(%arg0: i32) -> (i32, i32) {
    %c0_i32 = arith.constant 0 : i32
    %c0_i32_0 = arith.constant 0 : i32
    return %arg0, %c0_i32 : i32, i32
  }
}

</mosaic_0001>

<llo_original>
// kernel: mapping_network.1
$region0: #{mapping_network.1}
  #allocation0 [shape = 'u32[]', space=smem, size = 0x4, offset = 0x4, fixed_abs, tag = 'smem constant byte address 0x4 - core index']
  #allocation1 [shape = 'u32[72,128]{1,0:T(1,128)}', space=vmem, size = 0x9000, scoped, tag = 'internal scratch']
  %s0 = inlined_call_operand.vmem [shape: bf16[8,512], index: 0, kind: input, shape index: {}]
  %s1 = inlined_call_operand.hbm [shape: bf16[640,256], index: 1, kind: input, shape index: {}]
  %s2 = inlined_call_operand.hbm [shape: bf16[256,128], index: 2, kind: input, shape index: {}]
  %s3 = inlined_call_operand.hbm [shape: bf16[4,128,128], index: 3, kind: input, shape index: {}]
  %s4 = inlined_call_operand.hbm [shape: bf16[256,512], index: 4, kind: input, shape index: {}]
  %s5 = inlined_call_operand.vmem [shape: f32[8,512], index: 5, kind: input, shape index: {}]
  %s6 = inlined_call_operand.hbm [shape: f32[8,512], index: 6, kind: output, shape index: {}]
  %s7 = sld [smem:[#allocation0]]
  $region50: #{mapping_network.1} parent=0
    _
  %s9 = ssub.s32 1, %s7
  %s10 = scalar_select 0, %s9, %s7
  $region1: #{mapping_network.1} parent=0
    #allocation2 [shape = 'u8[327680]{0}', space=vmem, size = 0x50000, scoped, tag = 'input window, operand 1, single buffered']
    #allocation3 [shape = 's32[1]{0}', space=sflag, size = 0x4, scoped, tag = 'scoped memory for mapping_network.1']
    #allocation4 [shape = 's32[1]{0}', space=sflag, size = 0x4, scoped, tag = 'scoped memory for mapping_network.1']
    #allocation5 [shape = 'u8[65536]{0}', space=vmem, size = 0x10000, scoped, tag = 'input window, operand 2, single buffered']
    #allocation6 [shape = 's32[1]{0}', space=sflag, size = 0x4, scoped, tag = 'scoped memory for mapping_network.1']
    #allocation7 [shape = 'u8[131072]{0}', space=vmem, size = 0x20000, scoped, tag = 'input window, operand 3, single buffered']
    #allocation8 [shape = 'u8[262144]{0}', space=vmem, size = 0x40000, scoped, tag = 'input window, operand 4, single buffered']
    #allocation9 [shape = 's32[1]{0}', space=sflag, size = 0x4, scoped, tag = 'scoped memory for mapping_network.1']
    #allocation10 [shape = 'u8[16384]{0}', space=vmem, size = 0x4000, scoped, tag = 'output window, operand 0, single buffered']
    %11 = vsyncpa [#allocation3], 0
    %12 = vsyncpa [#allocation6], 0
    %13 = vsyncpa [#allocation9], 0
    %14 = vsyncpa [#allocation4], 0
    // Predicated region
    $region2: #{mapping_network.1} parent=1 // pred_check
      _
    $region3: #{mapping_network.1} parent=1 // pred_check_branch
      %16 = sbr.rel (0) target = $region5
    $region4: #{mapping_network.1} parent=1 // pred_region
      _
    $region5: #{mapping_network.1} parent=1 // pred_fallthru
      _
    // Predicated region
    $region6: #{mapping_network.1} parent=1 // pred_check
      _
    $region7: #{mapping_network.1} parent=1 // pred_check_branch
      %18 = sbr.rel (0) target = $region9
    $region8: #{mapping_network.1} parent=1 // pred_region
      %20 = vsyncadd [#allocation3], 0
      %s21 = sshll.u32 %s1, 4
      %s22 = int_to_ptr.hbm [resolvable:$true] %s21
      %s23 = sshll.u32 [#allocation2], 4
      %s24 = int_to_ptr.vmem [resolvable:$true] %s23
      %29 = dma.hbm_to_vmem [thread:$0]  %s22, 10240, %s24, [#allocation3], 128, 128, 8
    $region9: #{mapping_network.1} parent=1 // pred_fallthru
      _
    // Predicated region
    $region10: #{mapping_network.1} parent=1 // pred_check
      _
    $region11: #{mapping_network.1} parent=1 // pred_check_branch
      %31 = sbr.rel (0) target = $region13
    $region12: #{mapping_network.1} parent=1 // pred_region
      %33 = vsyncadd [#allocation6], 0
      %s34 = sshll.u32 %s2, 4
      %s35 = int_to_ptr.hbm [resolvable:$true] %s34
      %s36 = sshll.u32 [#allocation5], 4
      %s37 = int_to_ptr.vmem [resolvable:$true] %s36
      %42 = dma.hbm_to_vmem [thread:$0]  %s35, 2048, %s37, [#allocation6], 64, 64, 4
    $region13: #{mapping_network.1} parent=1 // pred_fallthru
      _
    // Predicated region
    $region14: #{mapping_network.1} parent=1 // pred_check
      _
    $region15: #{mapping_network.1} parent=1 // pred_check_branch
      %44 = sbr.rel (0) target = $region17
    $region16: #{mapping_network.1} parent=1 // pred_region
      %46 = vsyncadd [#allocation6], 0
      %s47 = sshll.u32 %s3, 4
      %s48 = int_to_ptr.hbm [resolvable:$true] %s47
      %s49 = sshll.u32 [#allocation7], 4
      %s50 = int_to_ptr.vmem [resolvable:$true] %s49
      %55 = dma.hbm_to_vmem [thread:$0]  %s48, 4096, %s50, [#allocation6], 64, 64, 4
    $region17: #{mapping_network.1} parent=1 // pred_fallthru
      _
    // Predicated region
    $region18: #{mapping_network.1} parent=1 // pred_check
      _
    $region19: #{mapping_network.1} parent=1 // pred_check_branch
      %57 = sbr.rel (0) target = $region21
    $region20: #{mapping_network.1} parent=1 // pred_region
      %59 = vsyncadd [#allocation9], 0
      %s60 = sshll.u32 %s4, 4
      %s61 = int_to_ptr.hbm [resolvable:$true] %s60
      %s62 = sshll.u32 [#allocation8], 4
      %s63 = int_to_ptr.vmem [resolvable:$true] %s62
      %68 = dma.hbm_to_vmem [thread:$0]  %s61, 8192, %s63, [#allocation9], 256, 256, 16
    $region21: #{mapping_network.1} parent=1 // pred_fallthru
      _
    // Predicated region
    $region22: #{mapping_network.1} parent=1 // pred_check
      _
    $region23: #{mapping_network.1} parent=1 // pred_check_branch
      %70 = sbr.rel (0) target = $region25
    $region24: #{mapping_network.1} parent=1 // pred_region
      _
    $region25: #{mapping_network.1} parent=1 // pred_fallthru
      _
    // Predicated region
    $region26: #{mapping_network.1} parent=1 // pred_check
      _
    $region27: #{mapping_network.1} parent=1 // pred_check_branch
      %72 = sbr.rel (0) target = $region29
    $region28: #{mapping_network.1} parent=1 // pred_region
      %74 = dma.done [#allocation3], 10240
    $region29: #{mapping_network.1} parent=1 // pred_fallthru
      _
    // Predicated region
    $region30: #{mapping_network.1} parent=1 // pred_check
      _
    $region31: #{mapping_network.1} parent=1 // pred_check_branch
      %76 = sbr.rel (0) target = $region33
    $region32: #{mapping_network.1} parent=1 // pred_region
      %78 = dma.done [#allocation6], 2048
    $region33: #{mapping_network.1} parent=1 // pred_fallthru
      _
    // Predicated region
    $region34: #{mapping_network.1} parent=1 // pred_check
      _
    $region35: #{mapping_network.1} parent=1 // pred_check_branch
      %80 = sbr.rel (0) target = $region37
    $region36: #{mapping_network.1} parent=1 // pred_region
      %82 = dma.done [#allocation6], 4096
    $region37: #{mapping_network.1} parent=1 // pred_fallthru
      _
    // Predicated region
    $region38: #{mapping_network.1} parent=1 // pred_check
      _
    $region39: #{mapping_network.1} parent=1 // pred_check_branch
      %84 = sbr.rel (0) target = $region41
    $region40: #{mapping_network.1} parent=1 // pred_region
      %86 = dma.done [#allocation9], 8192
    $region41: #{mapping_network.1} parent=1 // pred_fallthru
      _
    %v87 = vld [vmem:[%s0] sm:$0xff]
    %v88 = vld [vmem:[%s0 + $0x8] sm:$0xff]
    %v89 = vld [vmem:[#allocation2] sm:$0xff]
    %v90 = vld [vmem:[#allocation2 + $0x8] sm:$0xff]
    %v91 = vld [vmem:[#allocation2 + $0x10] sm:$0xff]
    %v92 = vld [vmem:[#allocation2 + $0x18] sm:$0xff]
    %v93 = vld [vmem:[#allocation2 + $0x20] sm:$0xff]
    %v94 = vld [vmem:[#allocation2 + $0x28] sm:$0xff]
    %v95 = vld [vmem:[#allocation2 + $0x30] sm:$0xff]
    %v96 = vld [vmem:[#allocation2 + $0x38] sm:$0xff]
    %v97 = vld [vmem:[#allocation2 + $0x40] sm:$0xff]
    %v98 = vld [vmem:[#allocation2 + $0x48] sm:$0xff]
    %v99 = vld [vmem:[#allocation2 + $0x50] sm:$0xff]
    %v100 = vld [vmem:[#allocation2 + $0x58] sm:$0xff]
    %v101 = vld [vmem:[#allocation2 + $0x60] sm:$0xff]
    %v102 = vld [vmem:[#allocation2 + $0x68] sm:$0xff]
    %v103 = vld [vmem:[#allocation2 + $0x70] sm:$0xff]
    %v104 = vld [vmem:[#allocation2 + $0x78] sm:$0xff]
    %v105 = vld [vmem:[#allocation2 + $0x80] sm:$0xff]
    %v106 = vld [vmem:[#allocation2 + $0x88] sm:$0xff]
    %v107 = vld [vmem:[#allocation2 + $0x90] sm:$0xff]
    %v108 = vld [vmem:[#allocation2 + $0x98] sm:$0xff]
    %v109 = vld [vmem:[#allocation2 + $0xa0] sm:$0xff]
    %v110 = vld [vmem:[#allocation2 + $0xa8] sm:$0xff]
    %v111 = vld [vmem:[#allocation2 + $0xb0] sm:$0xff]
    %v112 = vld [vmem:[#allocation2 + $0xb8] sm:$0xff]
    %v113 = vld [vmem:[#allocation2 + $0xc0] sm:$0xff]
    %v114 = vld [vmem:[#allocation2 + $0xc8] sm:$0xff]
    %v115 = vld [vmem:[#allocation2 + $0xd0] sm:$0xff]
    %v116 = vld [vmem:[#allocation2 + $0xd8] sm:$0xff]
    %v117 = vld [vmem:[#allocation2 + $0xe0] sm:$0xff]
    %v118 = vld [vmem:[#allocation2 + $0xe8] sm:$0xff]
    %v119 = vld [vmem:[#allocation2 + $0xf0] sm:$0xff]
    %v120 = vld [vmem:[#allocation2 + $0xf8] sm:$0xff]
    %v121 = vld [vmem:[#allocation2 + $0x100] sm:$0xff]
    %v122 = vld [vmem:[#allocation2 + $0x108] sm:$0xff]
    %v123 = vld [vmem:[#allocation2 + $0x110] sm:$0xff]
    %v124 = vld [vmem:[#allocation2 + $0x118] sm:$0xff]
    %v125 = vld [vmem:[#allocation2 + $0x120] sm:$0xff]
    %v126 = vld [vmem:[#allocation2 + $0x128] sm:$0xff]
    %v127 = vld [vmem:[#allocation2 + $0x130] sm:$0xff]
    %v128 = vld [vmem:[#allocation2 + $0x138] sm:$0xff]
    %v129 = vld [vmem:[#allocation2 + $0x140] sm:$0xff]
    %v130 = vld [vmem:[#allocation2 + $0x148] sm:$0xff]
    %v131 = vld [vmem:[#allocation2 + $0x150] sm:$0xff]
    %v132 = vld [vmem:[#allocation2 + $0x158] sm:$0xff]
    %v133 = vld [vmem:[#allocation2 + $0x160] sm:$0xff]
    %v134 = vld [vmem:[#allocation2 + $0x168] sm:$0xff]
    %v135 = vld [vmem:[#allocation2 + $0x170] sm:$0xff]
    %v136 = vld [vmem:[#allocation2 + $0x178] sm:$0xff]
    %v137 = vld [vmem:[#allocation2 + $0x180] sm:$0xff]
    %v138 = vld [vmem:[#allocation2 + $0x188] sm:$0xff]
    %v139 = vld [vmem:[#allocation2 + $0x190] sm:$0xff]
    %v140 = vld [vmem:[#allocation2 + $0x198] sm:$0xff]
    %v141 = vld [vmem:[#allocation2 + $0x1a0] sm:$0xff]
    %v142 = vld [vmem:[#allocation2 + $0x1a8] sm:$0xff]
    %v143 = vld [vmem:[#allocation2 + $0x1b0] sm:$0xff]
    %v144 = vld [vmem:[#allocation2 + $0x1b8] sm:$0xff]
    %v145 = vld [vmem:[#allocation2 + $0x1c0] sm:$0xff]
    %v146 = vld [vmem:[#allocation2 + $0x1c8] sm:$0xff]
    %v147 = vld [vmem:[#allocation2 + $0x1d0] sm:$0xff]
    %v148 = vld [vmem:[#allocation2 + $0x1d8] sm:$0xff]
    %v149 = vld [vmem:[#allocation2 + $0x1e0] sm:$0xff]
    %v150 = vld [vmem:[#allocation2 + $0x1e8] sm:$0xff]
    %v151 = vld [vmem:[#allocation2 + $0x1f0] sm:$0xff]
    %v152 = vld [vmem:[#allocation2 + $0x1f8] sm:$0xff]
    %v153 = vld [vmem:[%s5] ss:$8 sm:$0x3]
    %v155 = vperm.slane %v153, 0
    %v156 = vperm.slane %v153, 1
    %v161 = vunpack.c.l.b16 %v87
    %v162 = vunpack.c.h.b16 %v87
    %v163 = vunpack.c.l.b16 %v88
    %v164 = vunpack.c.h.b16 %v88
    %v165 = vpack.c.b16 %v161, %v161
    %v166 = vpack.c.b16 %v162, %v162
    %v167 = vpack.c.b16 %v163, %v163
    %v168 = vpack.c.b16 %v164, %v164
    %v237 = vunpack.c.l.b16 %v89
    %v238 = vunpack.c.h.b16 %v89
    %v239 = vunpack.c.l.b16 %v90
    %v240 = vunpack.c.h.b16 %v90
    %v241 = vunpack.c.l.b16 %v91
    %v242 = vunpack.c.h.b16 %v91
    %v243 = vunpack.c.l.b16 %v92
    %v244 = vunpack.c.h.b16 %v92
    %v245 = vunpack.c.l.b16 %v93
    %v246 = vunpack.c.h.b16 %v93
    %v247 = vunpack.c.l.b16 %v94
    %v248 = vunpack.c.h.b16 %v94
    %v249 = vunpack.c.l.b16 %v95
    %v250 = vunpack.c.h.b16 %v95
    %v251 = vunpack.c.l.b16 %v96
    %v252 = vunpack.c.h.b16 %v96
    %v253 = vunpack.c.l.b16 %v97
    %v254 = vunpack.c.h.b16 %v97
    %v255 = vunpack.c.l.b16 %v98
    %v256 = vunpack.c.h.b16 %v98
    %v257 = vunpack.c.l.b16 %v99
    %v258 = vunpack.c.h.b16 %v99
    %v259 = vunpack.c.l.b16 %v100
    %v260 = vunpack.c.h.b16 %v100
    %v261 = vunpack.c.l.b16 %v101
    %v262 = vunpack.c.h.b16 %v101
    %v263 = vunpack.c.l.b16 %v102
    %v264 = vunpack.c.h.b16 %v102
    %v265 = vunpack.c.l.b16 %v103
    %v266 = vunpack.c.h.b16 %v103
    %v267 = vunpack.c.l.b16 %v104
    %v268 = vunpack.c.h.b16 %v104
    %v269 = vunpack.c.l.b16 %v105
    %v270 = vunpack.c.h.b16 %v105
    %v271 = vunpack.c.l.b16 %v106
    %v272 = vunpack.c.h.b16 %v106
    %v273 = vunpack.c.l.b16 %v107
    %v274 = vunpack.c.h.b16 %v107
    %v275 = vunpack.c.l.b16 %v108
    %v276 = vunpack.c.h.b16 %v108
    %v277 = vunpack.c.l.b16 %v109
    %v278 = vunpack.c.h.b16 %v109
    %v279 = vunpack.c.l.b16 %v110
    %v280 = vunpack.c.h.b16 %v110
    %v281 = vunpack.c.l.b16 %v111
    %v282 = vunpack.c.h.b16 %v111
    %v283 = vunpack.c.l.b16 %v112
    %v284 = vunpack.c.h.b16 %v112
    %v285 = vunpack.c.l.b16 %v113
    %v286 = vunpack.c.h.b16 %v113
    %v287 = vunpack.c.l.b16 %v114
    %v288 = vunpack.c.h.b16 %v114
    %v289 = vunpack.c.l.b16 %v115
    %v290 = vunpack.c.h.b16 %v115
    %v291 = vunpack.c.l.b16 %v116
    %v292 = vunpack.c.h.b16 %v116
    %v293 = vunpack.c.l.b16 %v117
    %v294 = vunpack.c.h.b16 %v117
    %v295 = vunpack.c.l.b16 %v118
    %v296 = vunpack.c.h.b16 %v118
    %v297 = vunpack.c.l.b16 %v119
    %v298 = vunpack.c.h.b16 %v119
    %v299 = vunpack.c.l.b16 %v120
    %v300 = vunpack.c.h.b16 %v120
    %v301 = vunpack.c.l.b16 %v121
    %v302 = vunpack.c.h.b16 %v121
    %v303 = vunpack.c.l.b16 %v122
    %v304 = vunpack.c.h.b16 %v122
    %v305 = vunpack.c.l.b16 %v123
    %v306 = vunpack.c.h.b16 %v123
    %v307 = vunpack.c.l.b16 %v124
    %v308 = vunpack.c.h.b16 %v124
    %v309 = vunpack.c.l.b16 %v125
    %v310 = vunpack.c.h.b16 %v125
    %v311 = vunpack.c.l.b16 %v126
    %v312 = vunpack.c.h.b16 %v126
    %v313 = vunpack.c.l.b16 %v127
    %v314 = vunpack.c.h.b16 %v127
    %v315 = vunpack.c.l.b16 %v128
    %v316 = vunpack.c.h.b16 %v128
    %v317 = vunpack.c.l.b16 %v129
    %v318 = vunpack.c.h.b16 %v129
    %v319 = vunpack.c.l.b16 %v130
    %v320 = vunpack.c.h.b16 %v130
    %v321 = vunpack.c.l.b16 %v131
    %v322 = vunpack.c.h.b16 %v131
    %v323 = vunpack.c.l.b16 %v132
    %v324 = vunpack.c.h.b16 %v132
    %v325 = vunpack.c.l.b16 %v133
    %v326 = vunpack.c.h.b16 %v133
    %v327 = vunpack.c.l.b16 %v134
    %v328 = vunpack.c.h.b16 %v134
    %v329 = vunpack.c.l.b16 %v135
    %v330 = vunpack.c.h.b16 %v135
    %v331 = vunpack.c.l.b16 %v136
    %v332 = vunpack.c.h.b16 %v136
    %v333 = vunpack.c.l.b16 %v137
    %v334 = vunpack.c.h.b16 %v137
    %v335 = vunpack.c.l.b16 %v138
    %v336 = vunpack.c.h.b16 %v138
    %v337 = vunpack.c.l.b16 %v139
    %v338 = vunpack.c.h.b16 %v139
    %v339 = vunpack.c.l.b16 %v140
    %v340 = vunpack.c.h.b16 %v140
    %v341 = vunpack.c.l.b16 %v141
    %v342 = vunpack.c.h.b16 %v141
    %v343 = vunpack.c.l.b16 %v142
    %v344 = vunpack.c.h.b16 %v142
    %v345 = vunpack.c.l.b16 %v143
    %v346 = vunpack.c.h.b16 %v143
    %v347 = vunpack.c.l.b16 %v144
    %v348 = vunpack.c.h.b16 %v144
    %v349 = vunpack.c.l.b16 %v145
    %v350 = vunpack.c.h.b16 %v145
    %v351 = vunpack.c.l.b16 %v146
    %v352 = vunpack.c.h.b16 %v146
    %v353 = vunpack.c.l.b16 %v147
    %v354 = vunpack.c.h.b16 %v147
    %v355 = vunpack.c.l.b16 %v148
    %v356 = vunpack.c.h.b16 %v148
    %v357 = vunpack.c.l.b16 %v149
    %v358 = vunpack.c.h.b16 %v149
    %v359 = vunpack.c.l.b16 %v150
    %v360 = vunpack.c.h.b16 %v150
    %v361 = vunpack.c.l.b16 %v151
    %v362 = vunpack.c.h.b16 %v151
    %v363 = vunpack.c.l.b16 %v152
    %v364 = vunpack.c.h.b16 %v152
    %v365 = vpack.c.b16 %v239, %v237
    %v366 = vpack.c.b16 %v240, %v238
    %v367 = vpack.c.b16 %v243, %v241
    %v368 = vpack.c.b16 %v244, %v242
    %v369 = vpack.c.b16 %v247, %v245
    %v370 = vpack.c.b16 %v248, %v246
    %v371 = vpack.c.b16 %v251, %v249
    %v372 = vpack.c.b16 %v252, %v250
    %v373 = vpack.c.b16 %v255, %v253
    %v374 = vpack.c.b16 %v256, %v254
    %v375 = vpack.c.b16 %v259, %v257
    %v376 = vpack.c.b16 %v260, %v258
    %v377 = vpack.c.b16 %v263, %v261
    %v378 = vpack.c.b16 %v264, %v262
    %v379 = vpack.c.b16 %v267, %v265
    %v380 = vpack.c.b16 %v268, %v266
    %v381 = vpack.c.b16 %v271, %v269
    %v382 = vpack.c.b16 %v272, %v270
    %v383 = vpack.c.b16 %v275, %v273
    %v384 = vpack.c.b16 %v276, %v274
    %v385 = vpack.c.b16 %v279, %v277
    %v386 = vpack.c.b16 %v280, %v278
    %v387 = vpack.c.b16 %v283, %v281
    %v388 = vpack.c.b16 %v284, %v282
    %v389 = vpack.c.b16 %v287, %v285
    %v390 = vpack.c.b16 %v288, %v286
    %v391 = vpack.c.b16 %v291, %v289
    %v392 = vpack.c.b16 %v292, %v290
    %v393 = vpack.c.b16 %v295, %v293
    %v394 = vpack.c.b16 %v296, %v294
    %v395 = vpack.c.b16 %v299, %v297
    %v396 = vpack.c.b16 %v300, %v298
    %v397 = vpack.c.b16 %v303, %v301
    %v398 = vpack.c.b16 %v304, %v302
    %v399 = vpack.c.b16 %v307, %v305
    %v400 = vpack.c.b16 %v308, %v306
    %v401 = vpack.c.b16 %v311, %v309
    %v402 = vpack.c.b16 %v312, %v310
    %v403 = vpack.c.b16 %v315, %v313
    %v404 = vpack.c.b16 %v316, %v314
    %v405 = vpack.c.b16 %v319, %v317
    %v406 = vpack.c.b16 %v320, %v318
    %v407 = vpack.c.b16 %v323, %v321
    %v408 = vpack.c.b16 %v324, %v322
    %v409 = vpack.c.b16 %v327, %v325
    %v410 = vpack.c.b16 %v328, %v326
    %v411 = vpack.c.b16 %v331, %v329
    %v412 = vpack.c.b16 %v332, %v330
    %v413 = vpack.c.b16 %v335, %v333
    %v414 = vpack.c.b16 %v336, %v334
    %v415 = vpack.c.b16 %v339, %v337
    %v416 = vpack.c.b16 %v340, %v338
    %v417 = vpack.c.b16 %v343, %v341
    %v418 = vpack.c.b16 %v344, %v342
    %v419 = vpack.c.b16 %v347, %v345
    %v420 = vpack.c.b16 %v348, %v346
    %v421 = vpack.c.b16 %v351, %v349
    %v422 = vpack.c.b16 %v352, %v350
    %v423 = vpack.c.b16 %v355, %v353
    %v424 = vpack.c.b16 %v356, %v354
    %v425 = vpack.c.b16 %v359, %v357
    %v426 = vpack.c.b16 %v360, %v358
    %v427 = vpack.c.b16 %v363, %v361
    %v428 = vpack.c.b16 %v364, %v362
    %493 = vmatpush.bf16.msra.mxu0 %v379
    %494 = vmatpush.bf16.msra.mxu0 %v377
    %495 = vmatpush.bf16.msra.mxu0 %v375
    %496 = vmatpush.bf16.msra.mxu0 %v373
    %497 = vmatpush.bf16.msra.mxu0 %v371
    %498 = vmatpush.bf16.msra.mxu0 %v369
    %499 = vmatpush.bf16.msra.mxu0 %v367
    %500 = vmatpush.bf16.msra.mxu0 %v365
    %501 = vmatmul.bf16.gmra.mxu0 %v165
    %v502 = vpop.f32.mrf.mxu0
    %v503 = vadd.f32 %v155, %v502
    %v504 = vpop.f32.mrf.mxu0
    %505 = vdwg.mxu0
    %506 = vmatpush.bf16.msra.mxu0 %v395
    %507 = vmatpush.bf16.msra.mxu0 %v393
    %508 = vmatpush.bf16.msra.mxu0 %v391
    %509 = vmatpush.bf16.msra.mxu0 %v389
    %510 = vmatpush.bf16.msra.mxu0 %v387
    %511 = vmatpush.bf16.msra.mxu0 %v385
    %512 = vmatpush.bf16.msra.mxu0 %v383
    %513 = vmatpush.bf16.msra.mxu0 %v381
    %514 = vmatmul.bf16.gmra.mxu0 %v166
    %v515 = vpop.f32.mrf.mxu0
    %v516 = vadd.f32 %v503, %v515
    %v517 = vpop.f32.mrf.mxu0
    %518 = vdwg.mxu0
    %519 = vmatpush.bf16.msra.mxu0 %v411
    %520 = vmatpush.bf16.msra.mxu0 %v409
    %521 = vmatpush.bf16.msra.mxu0 %v407
    %522 = vmatpush.bf16.msra.mxu0 %v405
    %523 = vmatpush.bf16.msra.mxu0 %v403
    %524 = vmatpush.bf16.msra.mxu0 %v401
    %525 = vmatpush.bf16.msra.mxu0 %v399
    %526 = vmatpush.bf16.msra.mxu0 %v397
    %527 = vmatmul.bf16.gmra.mxu0 %v167
    %v528 = vpop.f32.mrf.mxu0
    %v529 = vadd.f32 %v516, %v528
    %v530 = vpop.f32.mrf.mxu0
    %531 = vdwg.mxu0
    %532 = vmatpush.bf16.msra.mxu0 %v427
    %533 = vmatpush.bf16.msra.mxu0 %v425
    %534 = vmatpush.bf16.msra.mxu0 %v423
    %535 = vmatpush.bf16.msra.mxu0 %v421
    %536 = vmatpush.bf16.msra.mxu0 %v419
    %537 = vmatpush.bf16.msra.mxu0 %v417
    %538 = vmatpush.bf16.msra.mxu0 %v415
    %539 = vmatpush.bf16.msra.mxu0 %v413
    %540 = vmatmul.bf16.gmra.mxu0 %v168
    %v541 = vpop.f32.mrf.mxu0
    %v542 = vadd.f32 %v529, %v541
    %v543 = vpop.f32.mrf.mxu0
    %544 = vdwg.mxu0
    %545 = vmatpush.bf16.msra.mxu0 %v380
    %546 = vmatpush.bf16.msra.mxu0 %v378
    %547 = vmatpush.bf16.msra.mxu0 %v376
    %548 = vmatpush.bf16.msra.mxu0 %v374
    %549 = vmatpush.bf16.msra.mxu0 %v372
    %550 = vmatpush.bf16.msra.mxu0 %v370
    %551 = vmatpush.bf16.msra.mxu0 %v368
    %552 = vmatpush.bf16.msra.mxu0 %v366
    %553 = vmatmul.bf16.gmra.mxu0 %v165
    %v554 = vpop.f32.mrf.mxu0
    %v555 = vadd.f32 %v156, %v554
    %v556 = vpop.f32.mrf.mxu0
    %557 = vdwg.mxu0
    %558 = vmatpush.bf16.msra.mxu0 %v396
    %559 = vmatpush.bf16.msra.mxu0 %v394
    %560 = vmatpush.bf16.msra.mxu0 %v392
    %561 = vmatpush.bf16.msra.mxu0 %v390
    %562 = vmatpush.bf16.msra.mxu0 %v388
    %563 = vmatpush.bf16.msra.mxu0 %v386
    %564 = vmatpush.bf16.msra.mxu0 %v384
    %565 = vmatpush.bf16.msra.mxu0 %v382
    %566 = vmatmul.bf16.gmra.mxu0 %v166
    %v567 = vpop.f32.mrf.mxu0
    %v568 = vadd.f32 %v555, %v567
    %v569 = vpop.f32.mrf.mxu0
    %570 = vdwg.mxu0
    %571 = vmatpush.bf16.msra.mxu0 %v412
    %572 = vmatpush.bf16.msra.mxu0 %v410
    %573 = vmatpush.bf16.msra.mxu0 %v408
    %574 = vmatpush.bf16.msra.mxu0 %v406
    %575 = vmatpush.bf16.msra.mxu0 %v404
    %576 = vmatpush.bf16.msra.mxu0 %v402
    %577 = vmatpush.bf16.msra.mxu0 %v400
    %578 = vmatpush.bf16.msra.mxu0 %v398
    %579 = vmatmul.bf16.gmra.mxu0 %v167
    %v580 = vpop.f32.mrf.mxu0
    %v581 = vadd.f32 %v568, %v580
    %v582 = vpop.f32.mrf.mxu0
    %583 = vdwg.mxu0
    %584 = vmatpush.bf16.msra.mxu0 %v428
    %585 = vmatpush.bf16.msra.mxu0 %v426
    %586 = vmatpush.bf16.msra.mxu0 %v424
    %587 = vmatpush.bf16.msra.mxu0 %v422
    %588 = vmatpush.bf16.msra.mxu0 %v420
    %589 = vmatpush.bf16.msra.mxu0 %v418
    %590 = vmatpush.bf16.msra.mxu0 %v416
    %591 = vmatpush.bf16.msra.mxu0 %v414
    %592 = vmatmul.bf16.gmra.mxu0 %v168
    %v593 = vpop.f32.mrf.mxu0
    %v594 = vadd.f32 %v581, %v593
    %v595 = vpop.f32.mrf.mxu0
    %596 = vdwg.mxu0
    %v597 = vmul.f32 %v542, 0.2
    %v598 = vmul.f32 %v594, 0.2
    %v599 = vmax.f32 %v542, %v597
    %v600 = vmax.f32 %v594, %v598
    %v601 = vpack.c.bf16 %v599, %v599
    %v602 = vpack.c.bf16 %v600, %v600
    %v603 = vld [vmem:[#allocation5] sm:$0xf]
    %v604 = vld [vmem:[#allocation5 + $0x4] sm:$0xf]
    %v605 = vld [vmem:[#allocation5 + $0x8] sm:$0xf]
    %v606 = vld [vmem:[#allocation5 + $0xc] sm:$0xf]
    %v607 = vld [vmem:[#allocation5 + $0x10] sm:$0xf]
    %v608 = vld [vmem:[#allocation5 + $0x14] sm:$0xf]
    %v609 = vld [vmem:[#allocation5 + $0x18] sm:$0xf]
    %v610 = vld [vmem:[#allocation5 + $0x1c] sm:$0xf]
    %v611 = vld [vmem:[#allocation5 + $0x20] sm:$0xf]
    %v612 = vld [vmem:[#allocation5 + $0x24] sm:$0xf]
    %v613 = vld [vmem:[#allocation5 + $0x28] sm:$0xf]
    %v614 = vld [vmem:[#allocation5 + $0x2c] sm:$0xf]
    %v615 = vld [vmem:[#allocation5 + $0x30] sm:$0xf]
    %v616 = vld [vmem:[#allocation5 + $0x34] sm:$0xf]
    %v617 = vld [vmem:[#allocation5 + $0x38] sm:$0xf]
    %v618 = vld [vmem:[#allocation5 + $0x3c] sm:$0xf]
    %v619 = vld [vmem:[#allocation5 + $0x40] sm:$0xf]
    %v620 = vld [vmem:[#allocation5 + $0x44] sm:$0xf]
    %v621 = vld [vmem:[#allocation5 + $0x48] sm:$0xf]
    %v622 = vld [vmem:[#allocation5 + $0x4c] sm:$0xf]
    %v623 = vld [vmem:[#allocation5 + $0x50] sm:$0xf]
    %v624 = vld [vmem:[#allocation5 + $0x54] sm:$0xf]
    %v625 = vld [vmem:[#allocation5 + $0x58] sm:$0xf]
    %v626 = vld [vmem:[#allocation5 + $0x5c] sm:$0xf]
    %v627 = vld [vmem:[#allocation5 + $0x60] sm:$0xf]
    %v628 = vld [vmem:[#allocation5 + $0x64] sm:$0xf]
    %v629 = vld [vmem:[#allocation5 + $0x68] sm:$0xf]
    %v630 = vld [vmem:[#allocation5 + $0x6c] sm:$0xf]
    %v631 = vld [vmem:[#allocation5 + $0x70] sm:$0xf]
    %v632 = vld [vmem:[#allocation5 + $0x74] sm:$0xf]
    %v633 = vld [vmem:[#allocation5 + $0x78] sm:$0xf]
    %v634 = vld [vmem:[#allocation5 + $0x7c] sm:$0xf]
    %v635 = vld [vmem:[%s5 + $0x1] ss:$0 sm:$0xff]
    %v668 = vunpack.c.l.b16 %v603
    %v669 = vunpack.c.l.b16 %v604
    %v670 = vunpack.c.l.b16 %v605
    %v671 = vunpack.c.l.b16 %v606
    %v672 = vunpack.c.l.b16 %v607
    %v673 = vunpack.c.l.b16 %v608
    %v674 = vunpack.c.l.b16 %v609
    %v675 = vunpack.c.l.b16 %v610
    %v676 = vunpack.c.l.b16 %v611
    %v677 = vunpack.c.l.b16 %v612
    %v678 = vunpack.c.l.b16 %v613
    %v679 = vunpack.c.l.b16 %v614
    %v680 = vunpack.c.l.b16 %v615
    %v681 = vunpack.c.l.b16 %v616
    %v682 = vunpack.c.l.b16 %v617
    %v683 = vunpack.c.l.b16 %v618
    %v684 = vunpack.c.l.b16 %v619
    %v685 = vunpack.c.l.b16 %v620
    %v686 = vunpack.c.l.b16 %v621
    %v687 = vunpack.c.l.b16 %v622
    %v688 = vunpack.c.l.b16 %v623
    %v689 = vunpack.c.l.b16 %v624
    %v690 = vunpack.c.l.b16 %v625
    %v691 = vunpack.c.l.b16 %v626
    %v692 = vunpack.c.l.b16 %v627
    %v693 = vunpack.c.l.b16 %v628
    %v694 = vunpack.c.l.b16 %v629
    %v695 = vunpack.c.l.b16 %v630
    %v696 = vunpack.c.l.b16 %v631
    %v697 = vunpack.c.l.b16 %v632
    %v698 = vunpack.c.l.b16 %v633
    %v699 = vunpack.c.l.b16 %v634
    %v700 = vpack.c.b16 %v669, %v668
    %v701 = vpack.c.b16 %v671, %v670
    %v702 = vpack.c.b16 %v673, %v672
    %v703 = vpack.c.b16 %v675, %v674
    %v704 = vpack.c.b16 %v677, %v676
    %v705 = vpack.c.b16 %v679, %v678
    %v706 = vpack.c.b16 %v681, %v680
    %v707 = vpack.c.b16 %v683, %v682
    %v708 = vpack.c.b16 %v685, %v684
    %v709 = vpack.c.b16 %v687, %v686
    %v710 = vpack.c.b16 %v689, %v688
    %v711 = vpack.c.b16 %v691, %v690
    %v712 = vpack.c.b16 %v693, %v692
    %v713 = vpack.c.b16 %v695, %v694
    %v714 = vpack.c.b16 %v697, %v696
    %v715 = vpack.c.b16 %v699, %v698
    %732 = vmatpush.bf16.msra.mxu0 %v707
    %733 = vmatpush.bf16.msra.mxu0 %v706
    %734 = vmatpush.bf16.msra.mxu0 %v705
    %735 = vmatpush.bf16.msra.mxu0 %v704
    %736 = vmatpush.bf16.msra.mxu0 %v703
    %737 = vmatpush.bf16.msra.mxu0 %v702
    %738 = vmatpush.bf16.msra.mxu0 %v701
    %739 = vmatpush.bf16.msra.mxu0 %v700
    %740 = vmatmul.bf16.gmra.mxu0 %v601
    %v741 = vpop.f32.mrf.mxu0
    %v742 = vadd.f32 %v635, %v741
    %v743 = vpop.f32.mrf.mxu0
    %744 = vdwg.mxu0
    %745 = vmatpush.bf16.msra.mxu0 %v715
    %746 = vmatpush.bf16.msra.mxu0 %v714
    %747 = vmatpush.bf16.msra.mxu0 %v713
    %748 = vmatpush.bf16.msra.mxu0 %v712
    %749 = vmatpush.bf16.msra.mxu0 %v711
    %750 = vmatpush.bf16.msra.mxu0 %v710
    %751 = vmatpush.bf16.msra.mxu0 %v709
    %752 = vmatpush.bf16.msra.mxu0 %v708
    %753 = vmatmul.bf16.gmra.mxu0 %v602
    %v754 = vpop.f32.mrf.mxu0
    %v755 = vadd.f32 %v742, %v754
    %v756 = vpop.f32.mrf.mxu0
    %757 = vdwg.mxu0
    %v758 = vmul.f32 %v755, 0.2
    %v759 = vmax.f32 %v755, %v758
    %v760 = vpack.c.bf16 %v759, %v759
    %v761 = vld [vmem:[#allocation7] sm:$0xf]
    %v762 = vld [vmem:[#allocation7 + $0x4] sm:$0xf]
    %v763 = vld [vmem:[#allocation7 + $0x8] sm:$0xf]
    %v764 = vld [vmem:[#allocation7 + $0xc] sm:$0xf]
    %v765 = vld [vmem:[#allocation7 + $0x10] sm:$0xf]
    %v766 = vld [vmem:[#allocation7 + $0x14] sm:$0xf]
    %v767 = vld [vmem:[#allocation7 + $0x18] sm:$0xf]
    %v768 = vld [vmem:[#allocation7 + $0x1c] sm:$0xf]
    %v769 = vld [vmem:[#allocation7 + $0x20] sm:$0xf]
    %v770 = vld [vmem:[#allocation7 + $0x24] sm:$0xf]
    %v771 = vld [vmem:[#allocation7 + $0x28] sm:$0xf]
    %v772 = vld [vmem:[#allocation7 + $0x2c] sm:$0xf]
    %v773 = vld [vmem:[#allocation7 + $0x30] sm:$0xf]
    %v774 = vld [vmem:[#allocation7 + $0x34] sm:$0xf]
    %v775 = vld [vmem:[#allocation7 + $0x38] sm:$0xf]
    %v776 = vld [vmem:[#allocation7 + $0x3c] sm:$0xf]
    %v777 = vld [vmem:[%s5 + $0x2] ss:$0 sm:$0xff]
    %v794 = vunpack.c.l.b16 %v761
    %v795 = vunpack.c.l.b16 %v762
    %v796 = vunpack.c.l.b16 %v763
    %v797 = vunpack.c.l.b16 %v764
    %v798 = vunpack.c.l.b16 %v765
    %v799 = vunpack.c.l.b16 %v766
    %v800 = vunpack.c.l.b16 %v767
    %v801 = vunpack.c.l.b16 %v768
    %v802 = vunpack.c.l.b16 %v769
    %v803 = vunpack.c.l.b16 %v770
    %v804 = vunpack.c.l.b16 %v771
    %v805 = vunpack.c.l.b16 %v772
    %v806 = vunpack.c.l.b16 %v773
    %v807 = vunpack.c.l.b16 %v774
    %v808 = vunpack.c.l.b16 %v775
    %v809 = vunpack.c.l.b16 %v776
    %v810 = vpack.c.b16 %v795, %v794
    %v811 = vpack.c.b16 %v797, %v796
    %v812 = vpack.c.b16 %v799, %v798
    %v813 = vpack.c.b16 %v801, %v800
    %v814 = vpack.c.b16 %v803, %v802
    %v815 = vpack.c.b16 %v805, %v804
    %v816 = vpack.c.b16 %v807, %v806
    %v817 = vpack.c.b16 %v809, %v808
    %826 = vmatpush.bf16.msra.mxu0 %v817
    %827 = vmatpush.bf16.msra.mxu0 %v816
    %828 = vmatpush.bf16.msra.mxu0 %v815
    %829 = vmatpush.bf16.msra.mxu0 %v814
    %830 = vmatpush.bf16.msra.mxu0 %v813
    %831 = vmatpush.bf16.msra.mxu0 %v812
    %832 = vmatpush.bf16.msra.mxu0 %v811
    %833 = vmatpush.bf16.msra.mxu0 %v810
    %834 = vmatmul.bf16.gmra.mxu0 %v760
    %v835 = vpop.f32.mrf.mxu0
    %v836 = vadd.f32 %v777, %v835
    %v837 = vpop.f32.mrf.mxu0
    %838 = vdwg.mxu0
    %v839 = vmul.f32 %v836, 0.2
    %v840 = vmax.f32 %v836, %v839
    %v841 = vpack.c.bf16 %v840, %v840
    %s842 = scalar_lea.vmem [#allocation7], 64
    %v843 = vld [vmem:[%s842] sm:$0xf]
    %v844 = vld [vmem:[%s842 + $0x4] sm:$0xf]
    %v845 = vld [vmem:[%s842 + $0x8] sm:$0xf]
    %v846 = vld [vmem:[%s842 + $0xc] sm:$0xf]
    %v847 = vld [vmem:[%s842 + $0x10] sm:$0xf]
    %v848 = vld [vmem:[%s842 + $0x14] sm:$0xf]
    %v849 = vld [vmem:[%s842 + $0x18] sm:$0xf]
    %v850 = vld [vmem:[%s842 + $0x1c] sm:$0xf]
    %v851 = vld [vmem:[%s842 + $0x20] sm:$0xf]
    %v852 = vld [vmem:[%s842 + $0x24] sm:$0xf]
    %v853 = vld [vmem:[%s842 + $0x28] sm:$0xf]
    %v854 = vld [vmem:[%s842 + $0x2c] sm:$0xf]
    %v855 = vld [vmem:[%s842 + $0x30] sm:$0xf]
    %v856 = vld [vmem:[%s842 + $0x34] sm:$0xf]
    %v857 = vld [vmem:[%s842 + $0x38] sm:$0xf]
    %v858 = vld [vmem:[%s842 + $0x3c] sm:$0xf]
    %v859 = vld [vmem:[%s5 + $0x3] ss:$0 sm:$0xff]
    %v876 = vunpack.c.l.b16 %v843
    %v877 = vunpack.c.l.b16 %v844
    %v878 = vunpack.c.l.b16 %v845
    %v879 = vunpack.c.l.b16 %v846
    %v880 = vunpack.c.l.b16 %v847
    %v881 = vunpack.c.l.b16 %v848
    %v882 = vunpack.c.l.b16 %v849
    %v883 = vunpack.c.l.b16 %v850
    %v884 = vunpack.c.l.b16 %v851
    %v885 = vunpack.c.l.b16 %v852
    %v886 = vunpack.c.l.b16 %v853
    %v887 = vunpack.c.l.b16 %v854
    %v888 = vunpack.c.l.b16 %v855
    %v889 = vunpack.c.l.b16 %v856
    %v890 = vunpack.c.l.b16 %v857
    %v891 = vunpack.c.l.b16 %v858
    %v892 = vpack.c.b16 %v877, %v876
    %v893 = vpack.c.b16 %v879, %v878
    %v894 = vpack.c.b16 %v881, %v880
    %v895 = vpack.c.b16 %v883, %v882
    %v896 = vpack.c.b16 %v885, %v884
    %v897 = vpack.c.b16 %v887, %v886
    %v898 = vpack.c.b16 %v889, %v888
    %v899 = vpack.c.b16 %v891, %v890
    %908 = vmatpush.bf16.msra.mxu0 %v899
    %909 = vmatpush.bf16.msra.mxu0 %v898
    %910 = vmatpush.bf16.msra.mxu0 %v897
    %911 = vmatpush.bf16.msra.mxu0 %v896
    %912 = vmatpush.bf16.msra.mxu0 %v895
    %913 = vmatpush.bf16.msra.mxu0 %v894
    %914 = vmatpush.bf16.msra.mxu0 %v893
    %915 = vmatpush.bf16.msra.mxu0 %v892
    %916 = vmatmul.bf16.gmra.mxu0 %v841
    %v917 = vpop.f32.mrf.mxu0
    %v918 = vadd.f32 %v859, %v917
    %v919 = vpop.f32.mrf.mxu0
    %920 = vdwg.mxu0
    %v921 = vmul.f32 %v918, 0.2
    %v922 = vmax.f32 %v918, %v921
    %v923 = vpack.c.bf16 %v922, %v922
    %s924 = scalar_lea.vmem [#allocation7], 128
    %v925 = vld [vmem:[%s924] sm:$0xf]
    %v926 = vld [vmem:[%s924 + $0x4] sm:$0xf]
    %v927 = vld [vmem:[%s924 + $0x8] sm:$0xf]
    %v928 = vld [vmem:[%s924 + $0xc] sm:$0xf]
    %v929 = vld [vmem:[%s924 + $0x10] sm:$0xf]
    %v930 = vld [vmem:[%s924 + $0x14] sm:$0xf]
    %v931 = vld [vmem:[%s924 + $0x18] sm:$0xf]
    %v932 = vld [vmem:[%s924 + $0x1c] sm:$0xf]
    %v933 = vld [vmem:[%s924 + $0x20] sm:$0xf]
    %v934 = vld [vmem:[%s924 + $0x24] sm:$0xf]
    %v935 = vld [vmem:[%s924 + $0x28] sm:$0xf]
    %v936 = vld [vmem:[%s924 + $0x2c] sm:$0xf]
    %v937 = vld [vmem:[%s924 + $0x30] sm:$0xf]
    %v938 = vld [vmem:[%s924 + $0x34] sm:$0xf]
    %v939 = vld [vmem:[%s924 + $0x38] sm:$0xf]
    %v940 = vld [vmem:[%s924 + $0x3c] sm:$0xf]
    %v941 = vld [vmem:[%s5 + $0x4] ss:$0 sm:$0xff]
    %v958 = vunpack.c.l.b16 %v925
    %v959 = vunpack.c.l.b16 %v926
    %v960 = vunpack.c.l.b16 %v927
    %v961 = vunpack.c.l.b16 %v928
    %v962 = vunpack.c.l.b16 %v929
    %v963 = vunpack.c.l.b16 %v930
    %v964 = vunpack.c.l.b16 %v931
    %v965 = vunpack.c.l.b16 %v932
    %v966 = vunpack.c.l.b16 %v933
    %v967 = vunpack.c.l.b16 %v934
    %v968 = vunpack.c.l.b16 %v935
    %v969 = vunpack.c.l.b16 %v936
    %v970 = vunpack.c.l.b16 %v937
    %v971 = vunpack.c.l.b16 %v938
    %v972 = vunpack.c.l.b16 %v939
    %v973 = vunpack.c.l.b16 %v940
    %v974 = vpack.c.b16 %v959, %v958
    %v975 = vpack.c.b16 %v961, %v960
    %v976 = vpack.c.b16 %v963, %v962
    %v977 = vpack.c.b16 %v965, %v964
    %v978 = vpack.c.b16 %v967, %v966
    %v979 = vpack.c.b16 %v969, %v968
    %v980 = vpack.c.b16 %v971, %v970
    %v981 = vpack.c.b16 %v973, %v972
    %990 = vmatpush.bf16.msra.mxu0 %v981
    %991 = vmatpush.bf16.msra.mxu0 %v980
    %992 = vmatpush.bf16.msra.mxu0 %v979
    %993 = vmatpush.bf16.msra.mxu0 %v978
    %994 = vmatpush.bf16.msra.mxu0 %v977
    %995 = vmatpush.bf16.msra.mxu0 %v976
    %996 = vmatpush.bf16.msra.mxu0 %v975
    %997 = vmatpush.bf16.msra.mxu0 %v974
    %998 = vmatmul.bf16.gmra.mxu0 %v923
    %v999 = vpop.f32.mrf.mxu0
    %v1000 = vadd.f32 %v941, %v999
    %v1001 = vpop.f32.mrf.mxu0
    %1002 = vdwg.mxu0
    %v1003 = vmul.f32 %v1000, 0.2
    %v1004 = vmax.f32 %v1000, %v1003
    %v1005 = vpack.c.bf16 %v1004, %v1004
    %s1006 = scalar_lea.vmem [#allocation7], 192
    %v1007 = vld [vmem:[%s1006] sm:$0xf]
    %v1008 = vld [vmem:[%s1006 + $0x4] sm:$0xf]
    %v1009 = vld [vmem:[%s1006 + $0x8] sm:$0xf]
    %v1010 = vld [vmem:[%s1006 + $0xc] sm:$0xf]
    %v1011 = vld [vmem:[%s1006 + $0x10] sm:$0xf]
    %v1012 = vld [vmem:[%s1006 + $0x14] sm:$0xf]
    %v1013 = vld [vmem:[%s1006 + $0x18] sm:$0xf]
    %v1014 = vld [vmem:[%s1006 + $0x1c] sm:$0xf]
    %v1015 = vld [vmem:[%s1006 + $0x20] sm:$0xf]
    %v1016 = vld [vmem:[%s1006 + $0x24] sm:$0xf]
    %v1017 = vld [vmem:[%s1006 + $0x28] sm:$0xf]
    %v1018 = vld [vmem:[%s1006 + $0x2c] sm:$0xf]
    %v1019 = vld [vmem:[%s1006 + $0x30] sm:$0xf]
    %v1020 = vld [vmem:[%s1006 + $0x34] sm:$0xf]
    %v1021 = vld [vmem:[%s1006 + $0x38] sm:$0xf]
    %v1022 = vld [vmem:[%s1006 + $0x3c] sm:$0xf]
    %v1023 = vld [vmem:[%s5 + $0x5] ss:$0 sm:$0xff]
    %v1040 = vunpack.c.l.b16 %v1007
    %v1041 = vunpack.c.l.b16 %v1008
    %v1042 = vunpack.c.l.b16 %v1009
    %v1043 = vunpack.c.l.b16 %v1010
    %v1044 = vunpack.c.l.b16 %v1011
    %v1045 = vunpack.c.l.b16 %v1012
    %v1046 = vunpack.c.l.b16 %v1013
    %v1047 = vunpack.c.l.b16 %v1014
    %v1048 = vunpack.c.l.b16 %v1015
    %v1049 = vunpack.c.l.b16 %v1016
    %v1050 = vunpack.c.l.b16 %v1017
    %v1051 = vunpack.c.l.b16 %v1018
    %v1052 = vunpack.c.l.b16 %v1019
    %v1053 = vunpack.c.l.b16 %v1020
    %v1054 = vunpack.c.l.b16 %v1021
    %v1055 = vunpack.c.l.b16 %v1022
    %v1056 = vpack.c.b16 %v1041, %v1040
    %v1057 = vpack.c.b16 %v1043, %v1042
    %v1058 = vpack.c.b16 %v1045, %v1044
    %v1059 = vpack.c.b16 %v1047, %v1046
    %v1060 = vpack.c.b16 %v1049, %v1048
    %v1061 = vpack.c.b16 %v1051, %v1050
    %v1062 = vpack.c.b16 %v1053, %v1052
    %v1063 = vpack.c.b16 %v1055, %v1054
    %1072 = vmatpush.bf16.msra.mxu0 %v1063
    %1073 = vmatpush.bf16.msra.mxu0 %v1062
    %1074 = vmatpush.bf16.msra.mxu0 %v1061
    %1075 = vmatpush.bf16.msra.mxu0 %v1060
    %1076 = vmatpush.bf16.msra.mxu0 %v1059
    %1077 = vmatpush.bf16.msra.mxu0 %v1058
    %1078 = vmatpush.bf16.msra.mxu0 %v1057
    %1079 = vmatpush.bf16.msra.mxu0 %v1056
    %1080 = vmatmul.bf16.gmra.mxu0 %v1005
    %v1081 = vpop.f32.mrf.mxu0
    %v1082 = vadd.f32 %v1023, %v1081
    %v1083 = vpop.f32.mrf.mxu0
    %1084 = vdwg.mxu0
    %v1085 = vmul.f32 %v1082, 0.2
    %v1086 = vmax.f32 %v1082, %v1085
    %v1087 = vpack.c.bf16 %v1086, %v1086
    %v1088 = vld [vmem:[#allocation2 + $0x200] sm:$0xff]
    %v1089 = vld [vmem:[#allocation2 + $0x208] sm:$0xff]
    %v1090 = vld [vmem:[#allocation2 + $0x210] sm:$0xff]
    %v1091 = vld [vmem:[#allocation2 + $0x218] sm:$0xff]
    %v1092 = vld [vmem:[#allocation2 + $0x220] sm:$0xff]
    %v1093 = vld [vmem:[#allocation2 + $0x228] sm:$0xff]
    %v1094 = vld [vmem:[#allocation2 + $0x230] sm:$0xff]
    %v1095 = vld [vmem:[#allocation2 + $0x238] sm:$0xff]
    %v1096 = vld [vmem:[#allocation2 + $0x240] sm:$0xff]
    %v1097 = vld [vmem:[#allocation2 + $0x248] sm:$0xff]
    %v1098 = vld [vmem:[#allocation2 + $0x250] sm:$0xff]
    %v1099 = vld [vmem:[#allocation2 + $0x258] sm:$0xff]
    %v1100 = vld [vmem:[#allocation2 + $0x260] sm:$0xff]
    %v1101 = vld [vmem:[#allocation2 + $0x268] sm:$0xff]
    %v1102 = vld [vmem:[#allocation2 + $0x270] sm:$0xff]
    %v1103 = vld [vmem:[#allocation2 + $0x278] sm:$0xff]
    %s1104 = scalar_lea.vmem %s5, 6
    %v1105 = vld [vmem:[%s1104] ss:$8 sm:$0x3]
    %v1107 = vperm.slane %v1105, 0
    %v1108 = vperm.slane %v1105, 1
    %v1127 = vunpack.c.l.b16 %v1088
    %v1128 = vunpack.c.h.b16 %v1088
    %v1129 = vunpack.c.l.b16 %v1089
    %v1130 = vunpack.c.h.b16 %v1089
    %v1131 = vunpack.c.l.b16 %v1090
    %v1132 = vunpack.c.h.b16 %v1090
    %v1133 = vunpack.c.l.b16 %v1091
    %v1134 = vunpack.c.h.b16 %v1091
    %v1135 = vunpack.c.l.b16 %v1092
    %v1136 = vunpack.c.h.b16 %v1092
    %v1137 = vunpack.c.l.b16 %v1093
    %v1138 = vunpack.c.h.b16 %v1093
    %v1139 = vunpack.c.l.b16 %v1094
    %v1140 = vunpack.c.h.b16 %v1094
    %v1141 = vunpack.c.l.b16 %v1095
    %v1142 = vunpack.c.h.b16 %v1095
    %v1143 = vunpack.c.l.b16 %v1096
    %v1144 = vunpack.c.h.b16 %v1096
    %v1145 = vunpack.c.l.b16 %v1097
    %v1146 = vunpack.c.h.b16 %v1097
    %v1147 = vunpack.c.l.b16 %v1098
    %v1148 = vunpack.c.h.b16 %v1098
    %v1149 = vunpack.c.l.b16 %v1099
    %v1150 = vunpack.c.h.b16 %v1099
    %v1151 = vunpack.c.l.b16 %v1100
    %v1152 = vunpack.c.h.b16 %v1100
    %v1153 = vunpack.c.l.b16 %v1101
    %v1154 = vunpack.c.h.b16 %v1101
    %v1155 = vunpack.c.l.b16 %v1102
    %v1156 = vunpack.c.h.b16 %v1102
    %v1157 = vunpack.c.l.b16 %v1103
    %v1158 = vunpack.c.h.b16 %v1103
    %v1159 = vpack.c.b16 %v1129, %v1127
    %v1160 = vpack.c.b16 %v1130, %v1128
    %v1161 = vpack.c.b16 %v1133, %v1131
    %v1162 = vpack.c.b16 %v1134, %v1132
    %v1163 = vpack.c.b16 %v1137, %v1135
    %v1164 = vpack.c.b16 %v1138, %v1136
    %v1165 = vpack.c.b16 %v1141, %v1139
    %v1166 = vpack.c.b16 %v1142, %v1140
    %v1167 = vpack.c.b16 %v1145, %v1143
    %v1168 = vpack.c.b16 %v1146, %v1144
    %v1169 = vpack.c.b16 %v1149, %v1147
    %v1170 = vpack.c.b16 %v1150, %v1148
    %v1171 = vpack.c.b16 %v1153, %v1151
    %v1172 = vpack.c.b16 %v1154, %v1152
    %v1173 = vpack.c.b16 %v1157, %v1155
    %v1174 = vpack.c.b16 %v1158, %v1156
    %1191 = vmatpush.bf16.msra.mxu0 %v1173
    %1192 = vmatpush.bf16.msra.mxu0 %v1171
    %1193 = vmatpush.bf16.msra.mxu0 %v1169
    %1194 = vmatpush.bf16.msra.mxu0 %v1167
    %1195 = vmatpush.bf16.msra.mxu0 %v1165
    %1196 = vmatpush.bf16.msra.mxu0 %v1163
    %1197 = vmatpush.bf16.msra.mxu0 %v1161
    %1198 = vmatpush.bf16.msra.mxu0 %v1159
    %1199 = vmatmul.bf16.gmra.mxu0 %v1087
    %v1200 = vpop.f32.mrf.mxu0
    %v1201 = vadd.f32 %v1107, %v1200
    %v1202 = vpop.f32.mrf.mxu0
    %1203 = vdwg.mxu0
    %1204 = vmatpush.bf16.msra.mxu0 %v1174
    %1205 = vmatpush.bf16.msra.mxu0 %v1172
    %1206 = vmatpush.bf16.msra.mxu0 %v1170
    %1207 = vmatpush.bf16.msra.mxu0 %v1168
    %1208 = vmatpush.bf16.msra.mxu0 %v1166
    %1209 = vmatpush.bf16.msra.mxu0 %v1164
    %1210 = vmatpush.bf16.msra.mxu0 %v1162
    %1211 = vmatpush.bf16.msra.mxu0 %v1160
    %1212 = vmatmul.bf16.gmra.mxu0 %v1087
    %v1213 = vpop.f32.mrf.mxu0
    %v1214 = vadd.f32 %v1108, %v1213
    %v1215 = vpop.f32.mrf.mxu0
    %1216 = vdwg.mxu0
    %v1217 = vmul.f32 %v1201, 0.2
    %v1218 = vmul.f32 %v1214, 0.2
    %v1219 = vmax.f32 %v1201, %v1217
    %v1220 = vmax.f32 %v1214, %v1218
    %v1221 = vpack.c.bf16 %v1219, %v1219
    %v1222 = vpack.c.bf16 %v1220, %v1220
    %v1223 = vld [vmem:[#allocation8] sm:$0xff]
    %v1224 = vld [vmem:[#allocation8 + $0x8] sm:$0xff]
    %v1225 = vld [vmem:[#allocation8 + $0x10] sm:$0xff]
    %v1226 = vld [vmem:[#allocation8 + $0x18] sm:$0xff]
    %v1227 = vld [vmem:[#allocation8 + $0x20] sm:$0xff]
    %v1228 = vld [vmem:[#allocation8 + $0x28] sm:$0xff]
    %v1229 = vld [vmem:[#allocation8 + $0x30] sm:$0xff]
    %v1230 = vld [vmem:[#allocation8 + $0x38] sm:$0xff]
    %v1231 = vld [vmem:[#allocation8 + $0x40] sm:$0xff]
    %v1232 = vld [vmem:[#allocation8 + $0x48] sm:$0xff]
    %v1233 = vld [vmem:[#allocation8 + $0x50] sm:$0xff]
    %v1234 = vld [vmem:[#allocation8 + $0x58] sm:$0xff]
    %v1235 = vld [vmem:[#allocation8 + $0x60] sm:$0xff]
    %v1236 = vld [vmem:[#allocation8 + $0x68] sm:$0xff]
    %v1237 = vld [vmem:[#allocation8 + $0x70] sm:$0xff]
    %v1238 = vld [vmem:[#allocation8 + $0x78] sm:$0xff]
    %v1239 = vld [vmem:[#allocation8 + $0x80] sm:$0xff]
    %v1240 = vld [vmem:[#allocation8 + $0x88] sm:$0xff]
    %v1241 = vld [vmem:[#allocation8 + $0x90] sm:$0xff]
    %v1242 = vld [vmem:[#allocation8 + $0x98] sm:$0xff]
    %v1243 = vld [vmem:[#allocation8 + $0xa0] sm:$0xff]
    %v1244 = vld [vmem:[#allocation8 + $0xa8] sm:$0xff]
    %v1245 = vld [vmem:[#allocation8 + $0xb0] sm:$0xff]
    %v1246 = vld [vmem:[#allocation8 + $0xb8] sm:$0xff]
    %v1247 = vld [vmem:[#allocation8 + $0xc0] sm:$0xff]
    %v1248 = vld [vmem:[#allocation8 + $0xc8] sm:$0xff]
    %v1249 = vld [vmem:[#allocation8 + $0xd0] sm:$0xff]
    %v1250 = vld [vmem:[#allocation8 + $0xd8] sm:$0xff]
    %v1251 = vld [vmem:[#allocation8 + $0xe0] sm:$0xff]
    %v1252 = vld [vmem:[#allocation8 + $0xe8] sm:$0xff]
    %v1253 = vld [vmem:[#allocation8 + $0xf0] sm:$0xff]
    %v1254 = vld [vmem:[#allocation8 + $0xf8] sm:$0xff]
    %v1255 = vld [vmem:[#allocation8 + $0x100] sm:$0xff]
    %v1256 = vld [vmem:[#allocation8 + $0x108] sm:$0xff]
    %v1257 = vld [vmem:[#allocation8 + $0x110] sm:$0xff]
    %v1258 = vld [vmem:[#allocation8 + $0x118] sm:$0xff]
    %v1259 = vld [vmem:[#allocation8 + $0x120] sm:$0xff]
    %v1260 = vld [vmem:[#allocation8 + $0x128] sm:$0xff]
    %v1261 = vld [vmem:[#allocation8 + $0x130] sm:$0xff]
    %v1262 = vld [vmem:[#allocation8 + $0x138] sm:$0xff]
    %v1263 = vld [vmem:[#allocation8 + $0x140] sm:$0xff]
    %v1264 = vld [vmem:[#allocation8 + $0x148] sm:$0xff]
    %v1265 = vld [vmem:[#allocation8 + $0x150] sm:$0xff]
    %v1266 = vld [vmem:[#allocation8 + $0x158] sm:$0xff]
    %v1267 = vld [vmem:[#allocation8 + $0x160] sm:$0xff]
    %v1268 = vld [vmem:[#allocation8 + $0x168] sm:$0xff]
    %v1269 = vld [vmem:[#allocation8 + $0x170] sm:$0xff]
    %v1270 = vld [vmem:[#allocation8 + $0x178] sm:$0xff]
    %v1271 = vld [vmem:[#allocation8 + $0x180] sm:$0xff]
    %v1272 = vld [vmem:[#allocation8 + $0x188] sm:$0xff]
    %v1273 = vld [vmem:[#allocation8 + $0x190] sm:$0xff]
    %v1274 = vld [vmem:[#allocation8 + $0x198] sm:$0xff]
    %v1275 = vld [vmem:[#allocation8 + $0x1a0] sm:$0xff]
    %v1276 = vld [vmem:[#allocation8 + $0x1a8] sm:$0xff]
    %v1277 = vld [vmem:[#allocation8 + $0x1b0] sm:$0xff]
    %v1278 = vld [vmem:[#allocation8 + $0x1b8] sm:$0xff]
    %v1279 = vld [vmem:[#allocation8 + $0x1c0] sm:$0xff]
    %v1280 = vld [vmem:[#allocation8 + $0x1c8] sm:$0xff]
    %v1281 = vld [vmem:[#allocation8 + $0x1d0] sm:$0xff]
    %v1282 = vld [vmem:[#allocation8 + $0x1d8] sm:$0xff]
    %v1283 = vld [vmem:[#allocation8 + $0x1e0] sm:$0xff]
    %v1284 = vld [vmem:[#allocation8 + $0x1e8] sm:$0xff]
    %v1285 = vld [vmem:[#allocation8 + $0x1f0] sm:$0xff]
    %v1286 = vld [vmem:[#allocation8 + $0x1f8] sm:$0xff]
    %s1287 = scalar_lea.vmem %s5, 7
    %v1288 = vld [vmem:[%s1287] ss:$8 sm:$0xf]
    %v1290 = vperm.slane %v1288, 0
    %v1291 = vperm.slane %v1288, 1
    %v1292 = vperm.slane %v1288, 2
    %v1293 = vperm.slane %v1288, 3
    %v1362 = vunpack.c.l.b16 %v1223
    %v1363 = vunpack.c.h.b16 %v1223
    %v1364 = vunpack.c.l.b16 %v1224
    %v1365 = vunpack.c.h.b16 %v1224
    %v1366 = vunpack.c.l.b16 %v1225
    %v1367 = vunpack.c.h.b16 %v1225
    %v1368 = vunpack.c.l.b16 %v1226
    %v1369 = vunpack.c.h.b16 %v1226
    %v1370 = vunpack.c.l.b16 %v1227
    %v1371 = vunpack.c.h.b16 %v1227
    %v1372 = vunpack.c.l.b16 %v1228
    %v1373 = vunpack.c.h.b16 %v1228
    %v1374 = vunpack.c.l.b16 %v1229
    %v1375 = vunpack.c.h.b16 %v1229
    %v1376 = vunpack.c.l.b16 %v1230
    %v1377 = vunpack.c.h.b16 %v1230
    %v1378 = vunpack.c.l.b16 %v1231
    %v1379 = vunpack.c.h.b16 %v1231
    %v1380 = vunpack.c.l.b16 %v1232
    %v1381 = vunpack.c.h.b16 %v1232
    %v1382 = vunpack.c.l.b16 %v1233
    %v1383 = vunpack.c.h.b16 %v1233
    %v1384 = vunpack.c.l.b16 %v1234
    %v1385 = vunpack.c.h.b16 %v1234
    %v1386 = vunpack.c.l.b16 %v1235
    %v1387 = vunpack.c.h.b16 %v1235
    %v1388 = vunpack.c.l.b16 %v1236
    %v1389 = vunpack.c.h.b16 %v1236
    %v1390 = vunpack.c.l.b16 %v1237
    %v1391 = vunpack.c.h.b16 %v1237
    %v1392 = vunpack.c.l.b16 %v1238
    %v1393 = vunpack.c.h.b16 %v1238
    %v1394 = vunpack.c.l.b16 %v1239
    %v1395 = vunpack.c.h.b16 %v1239
    %v1396 = vunpack.c.l.b16 %v1240
    %v1397 = vunpack.c.h.b16 %v1240
    %v1398 = vunpack.c.l.b16 %v1241
    %v1399 = vunpack.c.h.b16 %v1241
    %v1400 = vunpack.c.l.b16 %v1242
    %v1401 = vunpack.c.h.b16 %v1242
    %v1402 = vunpack.c.l.b16 %v1243
    %v1403 = vunpack.c.h.b16 %v1243
    %v1404 = vunpack.c.l.b16 %v1244
    %v1405 = vunpack.c.h.b16 %v1244
    %v1406 = vunpack.c.l.b16 %v1245
    %v1407 = vunpack.c.h.b16 %v1245
    %v1408 = vunpack.c.l.b16 %v1246
    %v1409 = vunpack.c.h.b16 %v1246
    %v1410 = vunpack.c.l.b16 %v1247
    %v1411 = vunpack.c.h.b16 %v1247
    %v1412 = vunpack.c.l.b16 %v1248
    %v1413 = vunpack.c.h.b16 %v1248
    %v1414 = vunpack.c.l.b16 %v1249
    %v1415 = vunpack.c.h.b16 %v1249
    %v1416 = vunpack.c.l.b16 %v1250
    %v1417 = vunpack.c.h.b16 %v1250
    %v1418 = vunpack.c.l.b16 %v1251
    %v1419 = vunpack.c.h.b16 %v1251
    %v1420 = vunpack.c.l.b16 %v1252
    %v1421 = vunpack.c.h.b16 %v1252
    %v1422 = vunpack.c.l.b16 %v1253
    %v1423 = vunpack.c.h.b16 %v1253
    %v1424 = vunpack.c.l.b16 %v1254
    %v1425 = vunpack.c.h.b16 %v1254
    %v1426 = vunpack.c.l.b16 %v1255
    %v1427 = vunpack.c.h.b16 %v1255
    %v1428 = vunpack.c.l.b16 %v1256
    %v1429 = vunpack.c.h.b16 %v1256
    %v1430 = vunpack.c.l.b16 %v1257
    %v1431 = vunpack.c.h.b16 %v1257
    %v1432 = vunpack.c.l.b16 %v1258
    %v1433 = vunpack.c.h.b16 %v1258
    %v1434 = vunpack.c.l.b16 %v1259
    %v1435 = vunpack.c.h.b16 %v1259
    %v1436 = vunpack.c.l.b16 %v1260
    %v1437 = vunpack.c.h.b16 %v1260
    %v1438 = vunpack.c.l.b16 %v1261
    %v1439 = vunpack.c.h.b16 %v1261
    %v1440 = vunpack.c.l.b16 %v1262
    %v1441 = vunpack.c.h.b16 %v1262
    %v1442 = vunpack.c.l.b16 %v1263
    %v1443 = vunpack.c.h.b16 %v1263
    %v1444 = vunpack.c.l.b16 %v1264
    %v1445 = vunpack.c.h.b16 %v1264
    %v1446 = vunpack.c.l.b16 %v1265
    %v1447 = vunpack.c.h.b16 %v1265
    %v1448 = vunpack.c.l.b16 %v1266
    %v1449 = vunpack.c.h.b16 %v1266
    %v1450 = vunpack.c.l.b16 %v1267
    %v1451 = vunpack.c.h.b16 %v1267
    %v1452 = vunpack.c.l.b16 %v1268
    %v1453 = vunpack.c.h.b16 %v1268
    %v1454 = vunpack.c.l.b16 %v1269
    %v1455 = vunpack.c.h.b16 %v1269
    %v1456 = vunpack.c.l.b16 %v1270
    %v1457 = vunpack.c.h.b16 %v1270
    %v1458 = vunpack.c.l.b16 %v1271
    %v1459 = vunpack.c.h.b16 %v1271
    %v1460 = vunpack.c.l.b16 %v1272
    %v1461 = vunpack.c.h.b16 %v1272
    %v1462 = vunpack.c.l.b16 %v1273
    %v1463 = vunpack.c.h.b16 %v1273
    %v1464 = vunpack.c.l.b16 %v1274
    %v1465 = vunpack.c.h.b16 %v1274
    %v1466 = vunpack.c.l.b16 %v1275
    %v1467 = vunpack.c.h.b16 %v1275
    %v1468 = vunpack.c.l.b16 %v1276
    %v1469 = vunpack.c.h.b16 %v1276
    %v1470 = vunpack.c.l.b16 %v1277
    %v1471 = vunpack.c.h.b16 %v1277
    %v1472 = vunpack.c.l.b16 %v1278
    %v1473 = vunpack.c.h.b16 %v1278
    %v1474 = vunpack.c.l.b16 %v1279
    %v1475 = vunpack.c.h.b16 %v1279
    %v1476 = vunpack.c.l.b16 %v1280
    %v1477 = vunpack.c.h.b16 %v1280
    %v1478 = vunpack.c.l.b16 %v1281
    %v1479 = vunpack.c.h.b16 %v1281
    %v1480 = vunpack.c.l.b16 %v1282
    %v1481 = vunpack.c.h.b16 %v1282
    %v1482 = vunpack.c.l.b16 %v1283
    %v1483 = vunpack.c.h.b16 %v1283
    %v1484 = vunpack.c.l.b16 %v1284
    %v1485 = vunpack.c.h.b16 %v1284
    %v1486 = vunpack.c.l.b16 %v1285
    %v1487 = vunpack.c.h.b16 %v1285
    %v1488 = vunpack.c.l.b16 %v1286
    %v1489 = vunpack.c.h.b16 %v1286
    %v1490 = vpack.c.b16 %v1366, %v1362
    %v1491 = vpack.c.b16 %v1367, %v1363
    %v1492 = vpack.c.b16 %v1368, %v1364
    %v1493 = vpack.c.b16 %v1369, %v1365
    %v1494 = vpack.c.b16 %v1374, %v1370
    %v1495 = vpack.c.b16 %v1375, %v1371
    %v1496 = vpack.c.b16 %v1376, %v1372
    %v1497 = vpack.c.b16 %v1377, %v1373
    %v1498 = vpack.c.b16 %v1382, %v1378
    %v1499 = vpack.c.b16 %v1383, %v1379
    %v1500 = vpack.c.b16 %v1384, %v1380
    %v1501 = vpack.c.b16 %v1385, %v1381
    %v1502 = vpack.c.b16 %v1390, %v1386
    %v1503 = vpack.c.b16 %v1391, %v1387
    %v1504 = vpack.c.b16 %v1392, %v1388
    %v1505 = vpack.c.b16 %v1393, %v1389
    %v1506 = vpack.c.b16 %v1398, %v1394
    %v1507 = vpack.c.b16 %v1399, %v1395
    %v1508 = vpack.c.b16 %v1400, %v1396
    %v1509 = vpack.c.b16 %v1401, %v1397
    %v1510 = vpack.c.b16 %v1406, %v1402
    %v1511 = vpack.c.b16 %v1407, %v1403
    %v1512 = vpack.c.b16 %v1408, %v1404
    %v1513 = vpack.c.b16 %v1409, %v1405
    %v1514 = vpack.c.b16 %v1414, %v1410
    %v1515 = vpack.c.b16 %v1415, %v1411
    %v1516 = vpack.c.b16 %v1416, %v1412
    %v1517 = vpack.c.b16 %v1417, %v1413
    %v1518 = vpack.c.b16 %v1422, %v1418
    %v1519 = vpack.c.b16 %v1423, %v1419
    %v1520 = vpack.c.b16 %v1424, %v1420
    %v1521 = vpack.c.b16 %v1425, %v1421
    %v1522 = vpack.c.b16 %v1430, %v1426
    %v1523 = vpack.c.b16 %v1431, %v1427
    %v1524 = vpack.c.b16 %v1432, %v1428
    %v1525 = vpack.c.b16 %v1433, %v1429
    %v1526 = vpack.c.b16 %v1438, %v1434
    %v1527 = vpack.c.b16 %v1439, %v1435
    %v1528 = vpack.c.b16 %v1440, %v1436
    %v1529 = vpack.c.b16 %v1441, %v1437
    %v1530 = vpack.c.b16 %v1446, %v1442
    %v1531 = vpack.c.b16 %v1447, %v1443
    %v1532 = vpack.c.b16 %v1448, %v1444
    %v1533 = vpack.c.b16 %v1449, %v1445
    %v1534 = vpack.c.b16 %v1454, %v1450
    %v1535 = vpack.c.b16 %v1455, %v1451
    %v1536 = vpack.c.b16 %v1456, %v1452
    %v1537 = vpack.c.b16 %v1457, %v1453
    %v1538 = vpack.c.b16 %v1462, %v1458
    %v1539 = vpack.c.b16 %v1463, %v1459
    %v1540 = vpack.c.b16 %v1464, %v1460
    %v1541 = vpack.c.b16 %v1465, %v1461
    %v1542 = vpack.c.b16 %v1470, %v1466
    %v1543 = vpack.c.b16 %v1471, %v1467
    %v1544 = vpack.c.b16 %v1472, %v1468
    %v1545 = vpack.c.b16 %v1473, %v1469
    %v1546 = vpack.c.b16 %v1478, %v1474
    %v1547 = vpack.c.b16 %v1479, %v1475
    %v1548 = vpack.c.b16 %v1480, %v1476
    %v1549 = vpack.c.b16 %v1481, %v1477
    %v1550 = vpack.c.b16 %v1486, %v1482
    %v1551 = vpack.c.b16 %v1487, %v1483
    %v1552 = vpack.c.b16 %v1488, %v1484
    %v1553 = vpack.c.b16 %v1489, %v1485
    %1618 = vmatpush.bf16.msra.mxu0 %v1518
    %1619 = vmatpush.bf16.msra.mxu0 %v1514
    %1620 = vmatpush.bf16.msra.mxu0 %v1510
    %1621 = vmatpush.bf16.msra.mxu0 %v1506
    %1622 = vmatpush.bf16.msra.mxu0 %v1502
    %1623 = vmatpush.bf16.msra.mxu0 %v1498
    %1624 = vmatpush.bf16.msra.mxu0 %v1494
    %1625 = vmatpush.bf16.msra.mxu0 %v1490
    %1626 = vmatmul.bf16.gmra.mxu0 %v1221
    %v1627 = vpop.f32.mrf.mxu0
    %v1628 = vadd.f32 %v1290, %v1627
    %v1629 = vpop.f32.mrf.mxu0
    %1630 = vdwg.mxu0
    %1631 = vmatpush.bf16.msra.mxu0 %v1550
    %1632 = vmatpush.bf16.msra.mxu0 %v1546
    %1633 = vmatpush.bf16.msra.mxu0 %v1542
    %1634 = vmatpush.bf16.msra.mxu0 %v1538
    %1635 = vmatpush.bf16.msra.mxu0 %v1534
    %1636 = vmatpush.bf16.msra.mxu0 %v1530
    %1637 = vmatpush.bf16.msra.mxu0 %v1526
    %1638 = vmatpush.bf16.msra.mxu0 %v1522
    %1639 = vmatmul.bf16.gmra.mxu0 %v1222
    %v1640 = vpop.f32.mrf.mxu0
    %v1641 = vadd.f32 %v1628, %v1640
    %v1642 = vpop.f32.mrf.mxu0
    %1643 = vdwg.mxu0
    %1644 = vmatpush.bf16.msra.mxu0 %v1519
    %1645 = vmatpush.bf16.msra.mxu0 %v1515
    %1646 = vmatpush.bf16.msra.mxu0 %v1511
    %1647 = vmatpush.bf16.msra.mxu0 %v1507
    %1648 = vmatpush.bf16.msra.mxu0 %v1503
    %1649 = vmatpush.bf16.msra.mxu0 %v1499
    %1650 = vmatpush.bf16.msra.mxu0 %v1495
    %1651 = vmatpush.bf16.msra.mxu0 %v1491
    %1652 = vmatmul.bf16.gmra.mxu0 %v1221
    %v1653 = vpop.f32.mrf.mxu0
    %v1654 = vadd.f32 %v1291, %v1653
    %v1655 = vpop.f32.mrf.mxu0
    %1656 = vdwg.mxu0
    %1657 = vmatpush.bf16.msra.mxu0 %v1551
    %1658 = vmatpush.bf16.msra.mxu0 %v1547
    %1659 = vmatpush.bf16.msra.mxu0 %v1543
    %1660 = vmatpush.bf16.msra.mxu0 %v1539
    %1661 = vmatpush.bf16.msra.mxu0 %v1535
    %1662 = vmatpush.bf16.msra.mxu0 %v1531
    %1663 = vmatpush.bf16.msra.mxu0 %v1527
    %1664 = vmatpush.bf16.msra.mxu0 %v1523
    %1665 = vmatmul.bf16.gmra.mxu0 %v1222
    %v1666 = vpop.f32.mrf.mxu0
    %v1667 = vadd.f32 %v1654, %v1666
    %v1668 = vpop.f32.mrf.mxu0
    %1669 = vdwg.mxu0
    %1670 = vmatpush.bf16.msra.mxu0 %v1520
    %1671 = vmatpush.bf16.msra.mxu0 %v1516
    %1672 = vmatpush.bf16.msra.mxu0 %v1512
    %1673 = vmatpush.bf16.msra.mxu0 %v1508
    %1674 = vmatpush.bf16.msra.mxu0 %v1504
    %1675 = vmatpush.bf16.msra.mxu0 %v1500
    %1676 = vmatpush.bf16.msra.mxu0 %v1496
    %1677 = vmatpush.bf16.msra.mxu0 %v1492
    %1678 = vmatmul.bf16.gmra.mxu0 %v1221
    %v1679 = vpop.f32.mrf.mxu0
    %v1680 = vadd.f32 %v1292, %v1679
    %v1681 = vpop.f32.mrf.mxu0
    %1682 = vdwg.mxu0
    %1683 = vmatpush.bf16.msra.mxu0 %v1552
    %1684 = vmatpush.bf16.msra.mxu0 %v1548
    %1685 = vmatpush.bf16.msra.mxu0 %v1544
    %1686 = vmatpush.bf16.msra.mxu0 %v1540
    %1687 = vmatpush.bf16.msra.mxu0 %v1536
    %1688 = vmatpush.bf16.msra.mxu0 %v1532
    %1689 = vmatpush.bf16.msra.mxu0 %v1528
    %1690 = vmatpush.bf16.msra.mxu0 %v1524
    %1691 = vmatmul.bf16.gmra.mxu0 %v1222
    %v1692 = vpop.f32.mrf.mxu0
    %v1693 = vadd.f32 %v1680, %v1692
    %v1694 = vpop.f32.mrf.mxu0
    %1695 = vdwg.mxu0
    %1696 = vmatpush.bf16.msra.mxu0 %v1521
    %1697 = vmatpush.bf16.msra.mxu0 %v1517
    %1698 = vmatpush.bf16.msra.mxu0 %v1513
    %1699 = vmatpush.bf16.msra.mxu0 %v1509
    %1700 = vmatpush.bf16.msra.mxu0 %v1505
    %1701 = vmatpush.bf16.msra.mxu0 %v1501
    %1702 = vmatpush.bf16.msra.mxu0 %v1497
    %1703 = vmatpush.bf16.msra.mxu0 %v1493
    %1704 = vmatmul.bf16.gmra.mxu0 %v1221
    %v1705 = vpop.f32.mrf.mxu0
    %v1706 = vadd.f32 %v1293, %v1705
    %v1707 = vpop.f32.mrf.mxu0
    %1708 = vdwg.mxu0
    %1709 = vmatpush.bf16.msra.mxu0 %v1553
    %1710 = vmatpush.bf16.msra.mxu0 %v1549
    %1711 = vmatpush.bf16.msra.mxu0 %v1545
    %1712 = vmatpush.bf16.msra.mxu0 %v1541
    %1713 = vmatpush.bf16.msra.mxu0 %v1537
    %1714 = vmatpush.bf16.msra.mxu0 %v1533
    %1715 = vmatpush.bf16.msra.mxu0 %v1529
    %1716 = vmatpush.bf16.msra.mxu0 %v1525
    %1717 = vmatmul.bf16.gmra.mxu0 %v1222
    %v1718 = vpop.f32.mrf.mxu0
    %v1719 = vadd.f32 %v1706, %v1718
    %v1720 = vpop.f32.mrf.mxu0
    %1721 = vdwg.mxu0
    %v1722 = vmul.f32 %v1641, 0.2
    %v1723 = vmul.f32 %v1667, 0.2
    %v1724 = vmul.f32 %v1693, 0.2
    %v1725 = vmul.f32 %v1719, 0.2
    %v1726 = vmax.f32 %v1641, %v1722
    %v1727 = vmax.f32 %v1667, %v1723
    %v1728 = vmax.f32 %v1693, %v1724
    %v1729 = vmax.f32 %v1719, %v1725
    %1730 = vst [vmem:[#allocation10] sm:$0xff] %v1726
    %1731 = vst [vmem:[#allocation10 + $0x8] sm:$0xff] %v1727
    %1732 = vst [vmem:[#allocation10 + $0x10] sm:$0xff] %v1728
    %1733 = vst [vmem:[#allocation10 + $0x18] sm:$0xff] %v1729
    // Predicated region
    $region42: #{mapping_network.1} parent=1 // pred_check
      _
    $region43: #{mapping_network.1} parent=1 // pred_check_branch
      %1735 = sbr.rel (0) target = $region45
    $region44: #{mapping_network.1} parent=1 // pred_region
      %1737 = vsyncadd [#allocation4], 0
      %s1739 = sshll.u32 [#allocation10], 4
      %s1740 = int_to_ptr.vmem [resolvable:$true] %s1739
      %s1741 = sshll.u32 %s6, 4
      %s1742 = int_to_ptr.hbm [resolvable:$true] %s1741
      %1744 = dma.vmem_to_hbm [thread:$0]  %s1740, 512, %s1742, [#allocation4]
    $region45: #{mapping_network.1} parent=1 // pred_fallthru
      _
    // Predicated region
    $region46: #{mapping_network.1} parent=1 // pred_check
      _
    $region47: #{mapping_network.1} parent=1 // pred_check_branch
      %1746 = sbr.rel (0) target = $region49
    $region48: #{mapping_network.1} parent=1 // pred_region
      %1748 = dma.done [#allocation4], 512
    $region49: #{mapping_network.1} parent=1 // pred_fallthru
      _
    %1749 = vsyncpa [#allocation3], 1
    %1750 = vsyncpa [#allocation6], 1
    %1751 = vsyncpa [#allocation9], 1
    %1752 = vsyncpa [#allocation4], 1

</llo_original>
